<compile_context>
chip_gen: v6e
topology: v6e:2x2x1
jax: 0.10.0
libtpu: 0.0.40
codegen_flags: <defaults>
</compile_context>

<pallas_src>
import jax
import jax.numpy as jnp
from jax import lax
from jax.experimental import pallas as pl
from jax.experimental.pallas import tpu as pltpu

EPS = 1e-5


def _round_up(x, m):
    return (x + m - 1) // m * m


def _vmem_limit_bytes():
    """Generation-aware scoped-VMEM budget (~48 MiB on v7x, ~96 MiB on v5e/v6e)."""
    try:
        cap = int(pltpu.get_tpu_info().vmem_capacity_bytes)
    except Exception:
        cap = 64 * 1024 * 1024
    return int(min(cap * 3 // 4, 100 * 1024 * 1024))


def _pick_tile_h(h, row_bytes, budget, target=32):
    """Largest divisor of h that fits the byte budget and is <= target (>=1)."""
    cap = max(1, min(target, h, budget // max(row_bytes, 1)))
    t = int(cap)
    while t > 1 and h % t:
        t -= 1
    return t


# ---------------------------------------------------------------------------
# Pass 1: conv3x3 + bias over a TILE_H-row block, fused with per-block
# per-channel sum / sum-of-squares (BN statistics).  Grid = (N, H // TILE_H),
# both axes parallel.  Weights / bias are grid-resident.
# ---------------------------------------------------------------------------
def _conv_bias_stats_kernel(x_ref, w_ref, b_ref, y_ref, stats_ref):
    th = y_ref.shape[1]
    w_out = y_ref.shape[2]
    coutp = y_ref.shape[3]
    cinp = x_ref.shape[-1]

    x = x_ref[0, 0]                                            # (TH+2, Wp, Cinp)

    # Fuse the 3 horizontal taps into the contraction (lane) dim once per block:
    # xs[h, c, kx*Cinp + cin] = x[h, c + kx, cin]; shape (TH+2, W, 3*Cinp).
    xs = jnp.concatenate([x[:, kx:kx + w_out, :] for kx in range(3)], axis=-1)

    acc = jnp.zeros((th * w_out, coutp), jnp.float32)
    for ky in range(3):
        # Leading-dim slice of xs selects whole (W, 3*Cinp) slabs (no repack when
        # W is a sublane multiple); three K=3*Cinp matmuls instead of nine K=Cinp.
        lhs = xs[ky:ky + th].reshape(th * w_out, 3 * cinp)
        acc = acc + jnp.dot(lhs, w_ref[ky], preferred_element_type=jnp.float32)

    y_ref[...] = (acc + b_ref[...]).reshape(1, th, w_out, coutp).astype(y_ref.dtype)

    # Per-(n, h_block) partial BN statistics on the PRE-bias f32 accumulator
    # (variance is shift-invariant; the bias is re-added to the mean in the
    # wrapper).  Written as independent output blocks -> no cross-step carry.
    s1 = jnp.sum(acc, axis=0, keepdims=True)
    s2 = jnp.sum(acc * acc, axis=0, keepdims=True)
    stats_ref[...] = jnp.concatenate([s1, s2], axis=0).reshape(1, 1, 2, coutp)


# ---------------------------------------------------------------------------
# Pass 2: folded BatchNorm (y * scale + shift) + ReLU over lane-dense blocks.
# ---------------------------------------------------------------------------
def _bn_relu_kernel(y_ref, scale_ref, shift_ref, out_ref):
    s = scale_ref[...].reshape(1, 1, 1, -1)
    t = shift_ref[...].reshape(1, 1, 1, -1)
    y = y_ref[...].astype(jnp.float32)
    out_ref[...] = jnp.maximum(y * s + t, 0.0).astype(out_ref.dtype)


def conv_batch_norm_nhwc(x_nhwc, weight, bias, gamma, beta, *,
                         compute_dtype=jnp.float32, tile_h=32,
                         keep_padded_channels=False):
    """ConvBatchNorm forward (train-mode BN) on an NHWC tensor.

    x_nhwc: (N, H, W, Cin); weight: (Cout, Cin, 3, 3); bias/gamma/beta: (Cout,).
    Returns (N, H, W, Cout) float32 (or (N, H, W, Coutp) if keep_padded_channels,
    which is the layout a following ConvBatchNorm layer would consume directly).
    """
    N, H, W, Cin = x_nhwc.shape
    Cout = weight.shape[0]
    Cinp = _round_up(Cin, 8)        # sublane-friendly contraction sub-dim
    Coutp = _round_up(Cout, 128)    # lane-dense output channels
    Wp = W + 2

    store_dtype = jnp.bfloat16 if compute_dtype == jnp.bfloat16 else jnp.float32
    vmem_limit = _vmem_limit_bytes()

    bpe = jnp.dtype(compute_dtype).itemsize
    spe = jnp.dtype(store_dtype).itemsize
    row_bytes = (2 * Wp * Cinp * bpe          # double-buffered input block
                 + 3 * W * Cinp * bpe         # fused-tap LHS slab
                 + W * Coutp * 4              # f32 accumulator
                 + 2 * W * Coutp * spe)       # double-buffered y block
    TH = _pick_tile_h(H, row_bytes, vmem_limit // 4, target=tile_h)
    nHb = H // TH

    # Single reflection-padded copy; channels zero-padded to a sublane multiple.
    xp = jnp.pad(x_nhwc, ((0, 0), (1, 1), (1, 1), (0, 0)), mode="reflect")
    xp = jnp.pad(xp, ((0, 0), (0, 0), (0, 0), (0, Cinp - Cin))).astype(compute_dtype)

    # Overlapping H-blocks with a 2-row halo -> read amplification (TH+2)/TH.
    row_idx = jnp.arange(nHb)[:, None] * TH + jnp.arange(TH + 2)[None, :]
    xb = jnp.take(xp, row_idx, axis=1)        # (N, nHb, TH+2, Wp, Cinp)

    # weight (Cout, Cin, 3, 3) -> (ky, kx*Cinp + cin, Coutp), matching xs layout.
    wt = jnp.transpose(weight, (2, 3, 1, 0))                        # (3,3,Cin,Cout)
    wt = jnp.pad(wt, ((0, 0), (0, 0), (0, Cinp - Cin), (0, Coutp - Cout)))
    wk = wt.reshape(3, 3 * Cinp, Coutp).astype(compute_dtype)
    b2 = jnp.pad(bias.astype(jnp.float32), (0, Coutp - Cout)).reshape(1, Coutp)

    y, stats = pl.pallas_call(
        _conv_bias_stats_kernel,
        grid=(N, nHb),
        in_specs=[
            pl.BlockSpec((1, 1, TH + 2, Wp, Cinp), lambda n, hb: (n, hb, 0, 0, 0)),
            pl.BlockSpec((3, 3 * Cinp, Coutp), lambda n, hb: (0, 0, 0)),   # resident
            pl.BlockSpec((1, Coutp), lambda n, hb: (0, 0)),                # resident
        ],
        out_specs=[
            pl.BlockSpec((1, TH, W, Coutp), lambda n, hb: (n, hb, 0, 0)),
            pl.BlockSpec((1, 1, 2, Coutp), lambda n, hb: (n, hb, 0, 0)),
        ],
        out_shape=(
            jax.ShapeDtypeStruct((N, H, W, Coutp), store_dtype),
            jax.ShapeDtypeStruct((N, nHb, 2, Coutp), jnp.float32),
        ),
        compiler_params=pltpu.CompilerParams(
            dimension_semantics=("parallel", "parallel"),
            vmem_limit_bytes=vmem_limit),
    )(xb, wk, b2)

    # Fold global batch statistics into per-channel scale/shift (tiny reduction).
    m_total = jnp.float32(N * H * W)
    ch_sum = jnp.sum(stats[:, :, 0, :], axis=(0, 1))
    ch_sq = jnp.sum(stats[:, :, 1, :], axis=(0, 1))
    mean_acc = ch_sum / m_total
    var = ch_sq / m_total - mean_acc * mean_acc          # biased variance (BN train)
    gamma_p = jnp.pad(gamma.astype(jnp.float32), (0, Coutp - Cout))
    beta_p = jnp.pad(beta.astype(jnp.float32), (0, Coutp - Cout))
    scale = gamma_p * lax.rsqrt(var + EPS)      # padded lanes: gamma=0 -> scale=0
    shift = beta_p - (mean_acc + b2[0]) * scale  # padded lanes: beta=0 -> shift=0

    out = pl.pallas_call(
        _bn_relu_kernel,
        grid=(N, nHb),
        in_specs=[
            pl.BlockSpec((1, TH, W, Coutp), lambda n, hb: (n, hb, 0, 0)),
            pl.BlockSpec((1, Coutp), lambda n, hb: (0, 0)),   # resident scale
            pl.BlockSpec((1, Coutp), lambda n, hb: (0, 0)),   # resident shift
        ],
        out_specs=pl.BlockSpec((1, TH, W, Coutp), lambda n, hb: (n, hb, 0, 0)),
        out_shape=jax.ShapeDtypeStruct((N, H, W, Coutp), jnp.float32),
        compiler_params=pltpu.CompilerParams(
            dimension_semantics=("parallel", "parallel"),
            vmem_limit_bytes=vmem_limit),
    )(y, scale.reshape(1, Coutp), shift.reshape(1, Coutp))

    if keep_padded_channels:
        return out
    return out[..., :Cout]


def conv_batch_norm(x_nchw, weight, bias, gamma, beta, **kwargs):
    """PyTorch-shaped entry point (NCHW in / NCHW out).

    Across a full VIEncoder the feature maps would stay NHWC (and channel-padded)
    end-to-end; these transposes + the channel slice exist only at the edges.
    """
    x_nhwc = jnp.transpose(x_nchw, (0, 2, 3, 1))
    out = conv_batch_norm_nhwc(x_nhwc, weight, bias, gamma, beta, **kwargs)
    return jnp.transpose(out, (0, 3, 1, 2))


def reference(x_nchw, weight, bias, gamma, beta):
    """Pure-JAX reference matching PyTorch ConvBatchNorm.forward (train-mode BN)."""
    xp = jnp.pad(x_nchw, ((0, 0), (0, 0), (1, 1), (1, 1)), mode="reflect")
    out = lax.conv_general_dilated(
        xp, weight, window_strides=(1, 1), padding="VALID",
        dimension_numbers=("NCHW", "OIHW", "NCHW"))
    out = out + bias[None, :, None, None]
    mean = out.mean(axis=(0, 2, 3), keepdims=True)
    var = ((out - mean) ** 2).mean(axis=(0, 2, 3), keepdims=True)
    out = gamma[None, :, None, None] * (out - mean) / jnp.sqrt(var + EPS) \
        + beta[None, :, None, None]
    return jnp.maximum(out, 0.0)


if __name__ == "__main__":
    key = jax.random.PRNGKey(0)
    k_x, k_w, k_b = jax.random.split(key, 3)

    N, Cin, Cout, H, W = 2, 4, 8, 16, 16

    x = jax.random.normal(k_x, (N, Cin, H, W), dtype=jnp.float32)
    # Deterministic synthetic parameter init (not a checkpoint load).
    weight = jax.random.normal(k_w, (Cout, Cin, 3, 3), dtype=jnp.float32) * 0.1
    bias = jax.random.normal(k_b, (Cout,), dtype=jnp.float32) * 0.1
    # BatchNorm2d affine params as PyTorch initializes them.
    gamma = jnp.ones((Cout,), dtype=jnp.float32)
    beta = jnp.zeros((Cout,), dtype=jnp.float32)

    ref = reference(x, weight, bias, gamma, beta)

    # f32 path: must match the reference tightly.
    out = jax.block_until_ready(conv_batch_norm(x, weight, bias, gamma, beta))
    assert out.shape == (N, Cout, H, W)
    err = jnp.max(jnp.abs(out - ref))
    assert jnp.allclose(out, ref, atol=1e-4, rtol=1e-4), f"f32 max abs err {err}"

    # bf16 matmul-operand + bf16 intermediate-storage path (perf config for
    # v6e/v7x): f32 accumulation, looser tolerance versus the f32 reference.
    out_bf16 = jax.block_until_ready(
        conv_batch_norm(x, weight, bias, gamma, beta,
                        compute_dtype=jnp.bfloat16))
    err_bf16 = jnp.max(jnp.abs(out_bf16 - ref))
    assert bool(jnp.isfinite(err_bf16)) and float(err_bf16) < 0.25, \
        f"bf16 max abs err {err_bf16}"

    print("KERNEL_OK")
</pallas_src>

<mosaic_0001>
module attributes {stable_mosaic.version = 11 : i64} {
  func.func @_conv_bias_stats_kernel(%arg0: i32, %arg1: i32, %arg2: memref<1x1x18x18x8xf32, #tpu.memory_space<vmem>>, %arg3: memref<3x24x128xf32, #tpu.memory_space<vmem>>, %arg4: memref<1x128xf32, #tpu.memory_space<vmem>>, %arg5: memref<1x16x16x128xf32, #tpu.memory_space<vmem>>, %arg6: memref<1x1x2x128xf32, #tpu.memory_space<vmem>>) attributes {dimension_semantics = [#tpu.dimension_semantics<parallel>, #tpu.dimension_semantics<parallel>], iteration_bounds = array<i64: 2, 1>, scalar_prefetch = 0 : i64, scratch_operands = 0 : i64, tpu.core_type = #tpu.core_type<tc>, window_params = [{transform_indices = @transform_0, window_bounds = array<i64: 1, 1, 18, 18, 8>}, {pipeline_mode = #tpu.pipeline_mode<synchronous>, transform_indices = @transform_1, window_bounds = array<i64: 3, 24, 128>}, {pipeline_mode = #tpu.pipeline_mode<synchronous>, transform_indices = @transform_2, window_bounds = array<i64: 1, 128>}, {transform_indices = @transform_3, window_bounds = array<i64: 1, 16, 16, 128>}, {transform_indices = @transform_4, window_bounds = array<i64: 1, 1, 2, 128>}]} {
    %c0 = arith.constant 0 : index
    %c0_0 = arith.constant 0 : index
    %c0_1 = arith.constant 0 : index
    %c0_2 = arith.constant 0 : index
    %c0_3 = arith.constant 0 : index
    %0 = vector.load %arg2[%c0, %c0_0, %c0_1, %c0_2, %c0_3] : memref<1x1x18x18x8xf32, #tpu.memory_space<vmem>>, vector<1x1x18x18x8xf32>
    %1 = vector.shape_cast %0 : vector<1x1x18x18x8xf32> to vector<18x18x8xf32>
    %2 = vector.extract_strided_slice %1 {offsets = [0, 0, 0], sizes = [18, 16, 8], strides = [1, 1, 1]} : vector<18x18x8xf32> to vector<18x16x8xf32>
    %3 = vector.extract_strided_slice %1 {offsets = [0, 1, 0], sizes = [18, 16, 8], strides = [1, 1, 1]} : vector<18x18x8xf32> to vector<18x16x8xf32>
    %4 = vector.extract_strided_slice %1 {offsets = [0, 2, 0], sizes = [18, 16, 8], strides = [1, 1, 1]} : vector<18x18x8xf32> to vector<18x16x8xf32>
    %5 = tpu.concatenate %2, %3, %4 in 2 : vector<18x16x8xf32>, vector<18x16x8xf32>, vector<18x16x8xf32> -> vector<18x16x24xf32>
    %cst = arith.constant 0.000000e+00 : f32
    %6 = vector.broadcast %cst : f32 to vector<256x128xf32>
    %7 = vector.extract_strided_slice %5 {offsets = [0, 0, 0], sizes = [16, 16, 24], strides = [1, 1, 1]} : vector<18x16x24xf32> to vector<16x16x24xf32>
    %8 = vector.shape_cast %7 : vector<16x16x24xf32> to vector<256x24xf32>
    %c0_4 = arith.constant 0 : index
    %c0_5 = arith.constant 0 : index
    %c0_6 = arith.constant 0 : index
    %9 = vector.load %arg3[%c0_4, %c0_5, %c0_6] : memref<3x24x128xf32, #tpu.memory_space<vmem>>, vector<1x24x128xf32>
    %10 = vector.shape_cast %9 : vector<1x24x128xf32> to vector<24x128xf32>
    %cst_7 = arith.constant dense<0.000000e+00> : vector<256x128xf32>
    %11 = tpu.matmul %8, %10, %cst_7 {dimension_numbers = #tpu.dot_dimension_numbers<[1], [0], [0], [1], [0, 0, 1, 1], [], []>} : vector<256x24xf32>, vector<24x128xf32>, vector<256x128xf32> -> vector<256x128xf32>
    %12 = arith.addf %6, %11 : vector<256x128xf32>
    %13 = vector.extract_strided_slice %5 {offsets = [1, 0, 0], sizes = [16, 16, 24], strides = [1, 1, 1]} : vector<18x16x24xf32> to vector<16x16x24xf32>
    %14 = vector.shape_cast %13 : vector<16x16x24xf32> to vector<256x24xf32>
    %c1 = arith.constant 1 : index
    %c0_8 = arith.constant 0 : index
    %c0_9 = arith.constant 0 : index
    %15 = vector.load %arg3[%c1, %c0_8, %c0_9] : memref<3x24x128xf32, #tpu.memory_space<vmem>>, vector<1x24x128xf32>
    %16 = vector.shape_cast %15 : vector<1x24x128xf32> to vector<24x128xf32>
    %cst_10 = arith.constant dense<0.000000e+00> : vector<256x128xf32>
    %17 = tpu.matmul %14, %16, %cst_10 {dimension_numbers = #tpu.dot_dimension_numbers<[1], [0], [0], [1], [0, 0, 1, 1], [], []>} : vector<256x24xf32>, vector<24x128xf32>, vector<256x128xf32> -> vector<256x128xf32>
    %18 = arith.addf %12, %17 : vector<256x128xf32>
    %19 = vector.extract_strided_slice %5 {offsets = [2, 0, 0], sizes = [16, 16, 24], strides = [1, 1, 1]} : vector<18x16x24xf32> to vector<16x16x24xf32>
    %20 = vector.shape_cast %19 : vector<16x16x24xf32> to vector<256x24xf32>
    %c2 = arith.constant 2 : index
    %c0_11 = arith.constant 0 : index
    %c0_12 = arith.constant 0 : index
    %21 = vector.load %arg3[%c2, %c0_11, %c0_12] : memref<3x24x128xf32, #tpu.memory_space<vmem>>, vector<1x24x128xf32>
    %22 = vector.shape_cast %21 : vector<1x24x128xf32> to vector<24x128xf32>
    %cst_13 = arith.constant dense<0.000000e+00> : vector<256x128xf32>
    %23 = tpu.matmul %20, %22, %cst_13 {dimension_numbers = #tpu.dot_dimension_numbers<[1], [0], [0], [1], [0, 0, 1, 1], [], []>} : vector<256x24xf32>, vector<24x128xf32>, vector<256x128xf32> -> vector<256x128xf32>
    %24 = arith.addf %18, %23 : vector<256x128xf32>
    %c0_14 = arith.constant 0 : index
    %c0_15 = arith.constant 0 : index
    %25 = vector.load %arg4[%c0_14, %c0_15] : memref<1x128xf32, #tpu.memory_space<vmem>>, vector<1x128xf32>
    %26 = vector.broadcast %25 : vector<1x128xf32> to vector<256x128xf32>
    %27 = arith.addf %24, %26 : vector<256x128xf32>
    %28 = vector.shape_cast %27 : vector<256x128xf32> to vector<1x16x16x128xf32>
    %c0_16 = arith.constant 0 : index
    %c0_17 = arith.constant 0 : index
    %c0_18 = arith.constant 0 : index
    %c0_19 = arith.constant 0 : index
    %29 = vector.load %arg5[%c0_16, %c0_17, %c0_18, %c0_19] : memref<1x16x16x128xf32, #tpu.memory_space<vmem>>, vector<1x16x16x128xf32>
    tpu.vector_store %arg5[%c0_16, %c0_17, %c0_18, %c0_19], %28 {strides = array<i32>} : memref<1x16x16x128xf32, #tpu.memory_space<vmem>>, vector<1x16x16x128xf32>,
    %cst_20 = arith.constant dense<0.000000e+00> : vector<128xf32>
    %30 = vector.multi_reduction <add>, %24, %cst_20 [0] : vector<256x128xf32> to vector<128xf32>
    %31 = vector.shape_cast %30 : vector<128xf32> to vector<1x128xf32>
    %32 = arith.mulf %24, %24 : vector<256x128xf32>
    %cst_21 = arith.constant dense<0.000000e+00> : vector<128xf32>
    %33 = vector.multi_reduction <add>, %32, %cst_21 [0] : vector<256x128xf32> to vector<128xf32>
    %34 = vector.shape_cast %33 : vector<128xf32> to vector<1x128xf32>
    %35 = tpu.concatenate %31, %34 in 0 : vector<1x128xf32>, vector<1x128xf32> -> vector<2x128xf32>
    %36 = vector.shape_cast %35 : vector<2x128xf32> to vector<1x1x2x128xf32>
    %c0_22 = arith.constant 0 : index
    %c0_23 = arith.constant 0 : index
    %c0_24 = arith.constant 0 : index
    %c0_25 = arith.constant 0 : index
    %37 = vector.load %arg6[%c0_22, %c0_23, %c0_24, %c0_25] : memref<1x1x2x128xf32, #tpu.memory_space<vmem>>, vector<1x1x2x128xf32>
    tpu.vector_store %arg6[%c0_22, %c0_23, %c0_24, %c0_25], %36 {strides = array<i32>} : memref<1x1x2x128xf32, #tpu.memory_space<vmem>>, vector<1x1x2x128xf32>,
    return
  }
  func.func @transform_0(%arg0: i32, %arg1: i32) -> (i32, i32, i32, i32, i32) {
    %c0_i32 = arith.constant 0 : i32
    %c0_i32_0 = arith.constant 0 : i32
    %c0_i32_1 = arith.constant 0 : i32
    %c0_i32_2 = arith.constant 0 : i32
    return %arg0, %arg1, %c0_i32, %c0_i32_0, %c0_i32_1 : i32, i32, i32, i32, i32
  }
  func.func @transform_1(%arg0: i32, %arg1: i32) -> (i32, i32, i32) {
    %c0_i32 = arith.constant 0 : i32
    %c0_i32_0 = arith.constant 0 : i32
    %c0_i32_1 = arith.constant 0 : i32
    %c0_i32_2 = arith.constant 0 : i32
    return %c0_i32, %c0_i32_0, %c0_i32_1 : i32, i32, i32
  }
  func.func @transform_2(%arg0: i32, %arg1: i32) -> (i32, i32) {
    %c0_i32 = arith.constant 0 : i32
    %c0_i32_0 = arith.constant 0 : i32
    %c0_i32_1 = arith.constant 0 : i32
    return %c0_i32, %c0_i32_0 : i32, i32
  }
  func.func @transform_3(%arg0: i32, %arg1: i32) -> (i32, i32, i32, i32) {
    %c0_i32 = arith.constant 0 : i32
    %c0_i32_0 = arith.constant 0 : i32
    %c0_i32_1 = arith.constant 0 : i32
    return %arg0, %arg1, %c0_i32, %c0_i32_0 : i32, i32, i32, i32
  }
  func.func @transform_4(%arg0: i32, %arg1: i32) -> (i32, i32, i32, i32) {
    %c0_i32 = arith.constant 0 : i32
    %c0_i32_0 = arith.constant 0 : i32
    %c0_i32_1 = arith.constant 0 : i32
    return %arg0, %arg1, %c0_i32, %c0_i32_0 : i32, i32, i32, i32
  }
}

</mosaic_0001>

<llo_original>
// kernel: tpu_custom_call.1
$region0: #{tpu_custom_call.1}
  #allocation0 [shape = 'u32[]', space=smem, size = 0x4, offset = 0x4, fixed_abs, tag = 'smem constant byte address 0x4 - core index']
  #allocation1 [shape = 'u32[144,128]{1,0:T(1,128)}', space=vmem, size = 0x12000, scoped, tag = 'internal scratch']
  %s0 = inlined_call_operand.vmem [shape: f32[2,1,18,18,8], index: 0, kind: input, shape index: {}]
  %s1 = inlined_call_operand.vmem [shape: f32[3,24,128], index: 1, kind: input, shape index: {}]
  %s2 = inlined_call_operand.vmem [shape: f32[1,128], index: 2, kind: input, shape index: {}]
  %s3 = inlined_call_operand.hbm [shape: f32[2,16,16,128], index: 3, kind: output, shape index: {0}]
  %s4 = inlined_call_operand.hbm [shape: f32[2,1,2,128], index: 4, kind: output, shape index: {1}]
  %5 = xla_tuple %s3, %s4
  %s6 = sld [smem:[#allocation0]]
  $region53: #{tpu_custom_call.1} parent=0
    _
  %s8 = ssub.s32 1, %s6
  %s9 = scalar_select 0, %s8, %s6
  $region1: #{tpu_custom_call.1} parent=0
    #allocation2 [shape = 'u8[262144]{0}', space=vmem, size = 0x40000, scoped, tag = 'output window, operand 0']
    #allocation3 [shape = 's32[2]{0}', space=sflag, size = 0x8, scoped, tag = 'scoped memory for tpu_custom_call.1']
    #allocation4 [shape = 'u8[2048]{0}', space=vmem, size = 0x800, scoped, tag = 'output window, operand 1']
    #allocation5 [shape = 's32[2]{0}', space=sflag, size = 0x8, scoped, tag = 'scoped memory for tpu_custom_call.1']
    %10 = vsyncpa [#allocation3], 0
    %s11 = scalar_lea.sflag [#allocation3], 1
    %12 = vsyncpa %s11, 0
    %13 = vsyncpa [#allocation5], 0
    %s14 = scalar_lea.sflag [#allocation5], 1
    %15 = vsyncpa %s14, 0
    loop: start=0, step=1, limit=4
    $region2: #{tpu_custom_call.1} parent=1 // loop_pre_header
      _
    $region3: #{tpu_custom_call.1} parent=1 // loop_header
      %s17 = sphi 0, %s21
      %p18 = scmp.ge.s32.totalorder %s17, 4
      %s24 = sphi 0, %s36
      %s25 = sphi 0, %s32
      %s26 = sphi 0, %s24
      %s27 = sphi 0, %s25
      %s28 = sphi 0, %s26
      %s29 = sphi 0, %s27
      %s41 = sphi 0, %s43
      %s44 = sphi 0, %s41
      %s45 = sphi 0, %s44
      %s61 = sphi 0, %s45
      %s65 = sphi 0, %s65
      %s67 = sphi 0, %s65
      %s68 = sphi 0, %s67
      %s82 = sphi 0, %s68
      %s86 = sphi 0, %s86
      %s88 = sphi 0, %s86
      %s89 = sphi 0, %s88
      %s103 = sphi 0, %s89
      %s111 = sphi 0, %s113
      %s114 = sphi 0, %s111
      %s115 = sphi 0, %s114
      %s131 = sphi 0, %s115
      %s139 = sphi 0, %s141
      %s142 = sphi 0, %s139
      %s143 = sphi 0, %s142
      %s159 = sphi 0, %s143
    $region4: #{tpu_custom_call.1} parent=1 // loop_header_branch
      %20 = sbr.rel (%p18) target = $region8
    $region5: #{tpu_custom_call.1} parent=1 // loop_body
      %s22 = ssub.s32 %s17, 1
      %s23 = ssub.s32 %s17, 2
      %s30 = sadd.s32 1, %s25
      %p31 = scmp.ge.s32.totalorder %s30, 1
      %s32 = scalar_select %p31, 0, %s30
      %s33 = sadd.s32 1, %s24
      %s34 = scalar_select %p31, %s33, %s24
      %p35 = scmp.ge.s32.totalorder %s34, 2
      %s36 = scalar_select %p35, 0, %s34
      %s37 = ssub.s32 %s24, %s36
      %s38 = ssub.s32 %s25, %s32
      %s39 = sor.u32 %s37, %s38
      %p40 = scmp.eq.s32.totalorder %s39, 0
      %s42 = sadd.s32 %s41, 1
      %s43 = scalar_select %p40, %s41, %s42
      %p46 = pneg %p40
      %p47 = scmp.eq.s32.totalorder %s17, 1
      %p48 = por %p46, %p47
      %p49 = scmp.ne.s32.totalorder %s41, %s44
      %p50 = scmp.eq.s32.totalorder %s17, 0
      %p51 = por %p49, %p50
      %p52 = scmp.ne.s32.totalorder %s41, %s44
      %p53 = scmp.eq.s32.totalorder %s22, 1
      %p54 = por %p52, %p53
      %p55 = scmp.ne.s32.totalorder %s44, %s45
      %p56 = scmp.eq.s32.totalorder %s22, 0
      %p57 = por %p55, %p56
      %p58 = scmp.ne.s32.totalorder %s44, %s45
      %p59 = scmp.eq.s32.totalorder %s23, 1
      %p60 = por %p58, %p59
      %p62 = scmp.ne.s32.totalorder %s45, %s61
      %p63 = scmp.eq.s32.totalorder %s23, 0
      %p64 = por %p62, %p63
      %s66 = sadd.s32 %s65, 1
      %p69 = scmp.eq.s32.totalorder %s17, 1
      %p70 = scmp.ne.s32.totalorder %s65, %s67
      %p71 = scmp.eq.s32.totalorder %s17, 0
      %p72 = por %p70, %p71
      %p73 = scmp.ne.s32.totalorder %s65, %s67
      %p74 = scmp.eq.s32.totalorder %s22, 1
      %p75 = por %p73, %p74
      %p76 = scmp.ne.s32.totalorder %s67, %s68
      %p77 = scmp.eq.s32.totalorder %s22, 0
      %p78 = por %p76, %p77
      %p79 = scmp.ne.s32.totalorder %s67, %s68
      %p80 = scmp.eq.s32.totalorder %s23, 1
      %p81 = por %p79, %p80
      %p83 = scmp.ne.s32.totalorder %s68, %s82
      %p84 = scmp.eq.s32.totalorder %s23, 0
      %p85 = por %p83, %p84
      %s87 = sadd.s32 %s86, 1
      %p90 = scmp.eq.s32.totalorder %s17, 1
      %p91 = scmp.ne.s32.totalorder %s86, %s88
      %p92 = scmp.eq.s32.totalorder %s17, 0
      %p93 = por %p91, %p92
      %p94 = scmp.ne.s32.totalorder %s86, %s88
      %p95 = scmp.eq.s32.totalorder %s22, 1
      %p96 = por %p94, %p95
      %p97 = scmp.ne.s32.totalorder %s88, %s89
      %p98 = scmp.eq.s32.totalorder %s22, 0
      %p99 = por %p97, %p98
      %p100 = scmp.ne.s32.totalorder %s88, %s89
      %p101 = scmp.eq.s32.totalorder %s23, 1
      %p102 = por %p100, %p101
      %p104 = scmp.ne.s32.totalorder %s89, %s103
      %p105 = scmp.eq.s32.totalorder %s23, 0
      %p106 = por %p104, %p105
      %s107 = ssub.s32 %s24, %s36
      %s108 = ssub.s32 %s25, %s32
      %s109 = sor.u32 %s107, %s108
      %p110 = scmp.eq.s32.totalorder %s109, 0
      %s112 = sadd.s32 %s111, 1
      %s113 = scalar_select %p110, %s111, %s112
      %p116 = pneg %p110
      %p117 = scmp.eq.s32.totalorder %s17, 1
      %p118 = por %p116, %p117
      %p119 = scmp.ne.s32.totalorder %s111, %s114
      %p120 = scmp.eq.s32.totalorder %s17, 0
      %p121 = por %p119, %p120
      %p122 = scmp.ne.s32.totalorder %s111, %s114
      %p123 = scmp.eq.s32.totalorder %s22, 1
      %p124 = por %p122, %p123
      %p125 = scmp.ne.s32.totalorder %s114, %s115
      %p126 = scmp.eq.s32.totalorder %s22, 0
      %p127 = por %p125, %p126
      %p128 = scmp.ne.s32.totalorder %s114, %s115
      %p129 = scmp.eq.s32.totalorder %s23, 1
      %p130 = por %p128, %p129
      %p132 = scmp.ne.s32.totalorder %s115, %s131
      %p133 = scmp.eq.s32.totalorder %s23, 0
      %p134 = por %p132, %p133
      %s135 = ssub.s32 %s24, %s36
      %s136 = ssub.s32 %s25, %s32
      %s137 = sor.u32 %s135, %s136
      %p138 = scmp.eq.s32.totalorder %s137, 0
      %s140 = sadd.s32 %s139, 1
      %s141 = scalar_select %p138, %s139, %s140
      %p144 = pneg %p138
      %p145 = scmp.eq.s32.totalorder %s17, 1
      %p146 = por %p144, %p145
      %p147 = scmp.ne.s32.totalorder %s139, %s142
      %p148 = scmp.eq.s32.totalorder %s17, 0
      %p149 = por %p147, %p148
      %p150 = scmp.ne.s32.totalorder %s139, %s142
      %p151 = scmp.eq.s32.totalorder %s22, 1
      %p152 = por %p150, %p151
      %p153 = scmp.ne.s32.totalorder %s142, %s143
      %p154 = scmp.eq.s32.totalorder %s22, 0
      %p155 = por %p153, %p154
      %p156 = scmp.ne.s32.totalorder %s142, %s143
      %p157 = scmp.eq.s32.totalorder %s23, 1
      %p158 = por %p156, %p157
      %p160 = scmp.ne.s32.totalorder %s143, %s159
      %p161 = scmp.eq.s32.totalorder %s23, 0
      %p162 = por %p160, %p161
      %p163 = scmp.le.s32.totalorder 1, %s17
      %p164 = scmp.lt.s32.totalorder %s17, 3
      %p165 = pnand %p163, %p164
      %p166 = pneg %p165
      // Predicated region
      $region9: #{tpu_custom_call.1} parent=5 // pred_check
        _
      $region10: #{tpu_custom_call.1} parent=5 // pred_check_branch
        %168 = sbr.rel (%p165) target = $region12
      $region11: #{tpu_custom_call.1} parent=5 // pred_region
        %s169 = ssub.s32 %s17, 1
        // Predicated region
        $region13: #{tpu_custom_call.1} parent=11 // pred_check
          %p170 = pneg %p78
        $region14: #{tpu_custom_call.1} parent=11 // pred_check_branch
          %172 = sbr.rel (%p170) target = $region16
        $region15: #{tpu_custom_call.1} parent=11 // pred_region
          _
        $region16: #{tpu_custom_call.1} parent=11 // pred_fallthru
          _
        // Predicated region
        $region17: #{tpu_custom_call.1} parent=11 // pred_check
          %p173 = pneg %p99
        $region18: #{tpu_custom_call.1} parent=11 // pred_check_branch
          %175 = sbr.rel (%p173) target = $region20
        $region19: #{tpu_custom_call.1} parent=11 // pred_region
          _
        $region20: #{tpu_custom_call.1} parent=11 // pred_fallthru
          _
      $region12: #{tpu_custom_call.1} parent=5 // pred_fallthru
        _
      %p176 = scmp.lt.s32.totalorder %s17, 2
      // Predicated region
      $region21: #{tpu_custom_call.1} parent=5 // pred_check
        %p177 = pneg %p176
      $region22: #{tpu_custom_call.1} parent=5 // pred_check_branch
        %179 = sbr.rel (%p177) target = $region24
      $region23: #{tpu_custom_call.1} parent=5 // pred_region
        // Predicated region
        $region25: #{tpu_custom_call.1} parent=23 // pred_check
          %p180 = pneg %p51
        $region26: #{tpu_custom_call.1} parent=23 // pred_check_branch
          %182 = sbr.rel (%p180) target = $region28
        $region27: #{tpu_custom_call.1} parent=23 // pred_region
          %p183 = scmp.lt.s32.totalorder %s24, 1
          %s184 = scalar_select %p183, %s24, 1
          %p185 = scmp.lt.s32.totalorder %s25, 0
          %s186 = scalar_select %p185, %s25, 0
          %s187 = smul.addr %s186, 54
          %s188 = smul.addr %s184, 54
          %s189 = sadd.s32 %s187, %s188
          %s190 = smul.addr %s189, 8
          %s191 = scalar_lea.vmem %s0, %s190
        $region28: #{tpu_custom_call.1} parent=23 // pred_fallthru
          _
      $region24: #{tpu_custom_call.1} parent=5 // pred_fallthru
        _
      %p192 = scmp.le.s32.totalorder 1, %s17
      %p193 = scmp.lt.s32.totalorder %s17, 3
      %p194 = pnand %p192, %p193
      %p195 = pneg %p194
      // Predicated region
      $region29: #{tpu_custom_call.1} parent=5 // pred_check
        _
      $region30: #{tpu_custom_call.1} parent=5 // pred_check_branch
        %197 = sbr.rel (%p194) target = $region32
      $region31: #{tpu_custom_call.1} parent=5 // pred_region
        %s198 = ssub.s32 %s17, 1
        %p199 = scmp.lt.s32.totalorder %s26, 1
        %s200 = scalar_select %p199, %s26, 1
        %p201 = scmp.lt.s32.totalorder %s27, 0
        %s202 = scalar_select %p201, %s27, 0
        %s203 = smul.addr %s202, 54
        %s204 = smul.addr %s200, 54
        %s205 = sadd.s32 %s203, %s204
        %s206 = smul.addr %s205, 8
        %s207 = scalar_lea.vmem %s0, %s206
        %p208 = pneg %p57
        %p209 = pneg %p54
        %p210 = pneg %p78
        %p211 = pneg %p75
        %p212 = pneg %p99
        %p213 = pneg %p96
        %p214 = pneg %p127
        %p215 = pneg %p124
        %s216 = sand.u32 %s114, 1
        %s217 = scalar_lea.sflag [#allocation3], %s216
        %s218 = sand.u32 %s114, 1
        %s219 = smul.addr %s218, 256
        %s220 = scalar_lea.vmem [#allocation2], %s219
        %p221 = pneg %p155
        %p222 = pneg %p152
        %s223 = sand.u32 %s142, 1
        %s224 = scalar_lea.sflag [#allocation5], %s223
        %s225 = sand.u32 %s142, 1
        %s226 = smul.addr %s225, 2
        %s227 = scalar_lea.vmem [#allocation4], %s226
        %p228 = scmp.lt.s32.totalorder %s26, 1
        %s229 = scalar_select %p228, %s26, 1
        %p230 = scmp.lt.s32.totalorder %s27, 0
        %s231 = scalar_select %p230, %s27, 0
        %s232 = smul.addr %s231, 54
        %s233 = smul.addr %s229, 54
        %s234 = sadd.s32 %s232, %s233
        %s235 = smul.addr %s234, 8
        %s236 = scalar_lea.vmem %s0, %s235
        %s237 = smul.u32 16, %s27
        %v238 = vld [vmem:[%s236] sm:$0xff]
        %v239 = vld [vmem:[%s236 + $0x8] sm:$0xff]
        %v240 = vld [vmem:[%s236 + $0x10] sm:$0x3]
        %v241 = vld [vmem:[%s236 + $0x18] sm:$0xff]
        %v242 = vld [vmem:[%s236 + $0x20] sm:$0xff]
        %v243 = vld [vmem:[%s236 + $0x28] sm:$0x3]
        %v244 = vld [vmem:[%s236 + $0x30] sm:$0xff]
        %v245 = vld [vmem:[%s236 + $0x38] sm:$0xff]
        %v246 = vld [vmem:[%s236 + $0x40] sm:$0x3]
        %v247 = vld [vmem:[%s236 + $0x48] sm:$0xff]
        %v248 = vld [vmem:[%s236 + $0x50] sm:$0xff]
        %v249 = vld [vmem:[%s236 + $0x58] sm:$0x3]
        %v250 = vld [vmem:[%s236 + $0x60] sm:$0xff]
        %v251 = vld [vmem:[%s236 + $0x68] sm:$0xff]
        %v252 = vld [vmem:[%s236 + $0x70] sm:$0x3]
        %v253 = vld [vmem:[%s236 + $0x78] sm:$0xff]
        %v254 = vld [vmem:[%s236 + $0x80] sm:$0xff]
        %v255 = vld [vmem:[%s236 + $0x88] sm:$0x3]
        %v256 = vld [vmem:[%s236 + $0x90] sm:$0xff]
        %v257 = vld [vmem:[%s236 + $0x98] sm:$0xff]
        %v258 = vld [vmem:[%s236 + $0xa0] sm:$0x3]
        %v259 = vld [vmem:[%s236 + $0xa8] sm:$0xff]
        %v260 = vld [vmem:[%s236 + $0xb0] sm:$0xff]
        %v261 = vld [vmem:[%s236 + $0xb8] sm:$0x3]
        %v262 = vld [vmem:[%s236 + $0xc0] sm:$0xff]
        %v263 = vld [vmem:[%s236 + $0xc8] sm:$0xff]
        %v264 = vld [vmem:[%s236 + $0xd0] sm:$0x3]
        %v265 = vld [vmem:[%s236 + $0xd8] sm:$0xff]
        %v266 = vld [vmem:[%s236 + $0xe0] sm:$0xff]
        %v267 = vld [vmem:[%s236 + $0xe8] sm:$0x3]
        %v268 = vld [vmem:[%s236 + $0xf0] sm:$0xff]
        %v269 = vld [vmem:[%s236 + $0xf8] sm:$0xff]
        %v270 = vld [vmem:[%s236 + $0x100] sm:$0x3]
        %v271 = vld [vmem:[%s236 + $0x108] sm:$0xff]
        %v272 = vld [vmem:[%s236 + $0x110] sm:$0xff]
        %v273 = vld [vmem:[%s236 + $0x118] sm:$0x3]
        %v274 = vld [vmem:[%s236 + $0x120] sm:$0xff]
        %v275 = vld [vmem:[%s236 + $0x128] sm:$0xff]
        %v276 = vld [vmem:[%s236 + $0x130] sm:$0x3]
        %v277 = vld [vmem:[%s236 + $0x138] sm:$0xff]
        %v278 = vld [vmem:[%s236 + $0x140] sm:$0xff]
        %v279 = vld [vmem:[%s236 + $0x148] sm:$0x3]
        %v280 = vld [vmem:[%s236 + $0x150] sm:$0xff]
        %v281 = vld [vmem:[%s236 + $0x158] sm:$0xff]
        %v282 = vld [vmem:[%s236 + $0x160] sm:$0x3]
        %v283 = vld [vmem:[%s236 + $0x168] sm:$0xff]
        %v284 = vld [vmem:[%s236 + $0x170] sm:$0xff]
        %v285 = vld [vmem:[%s236 + $0x178] sm:$0x3]
        %v286 = vld [vmem:[%s236 + $0x180] sm:$0xff]
        %v287 = vld [vmem:[%s236 + $0x188] sm:$0xff]
        %v288 = vld [vmem:[%s236 + $0x190] sm:$0x3]
        %v289 = vld [vmem:[%s236 + $0x198] sm:$0xff]
        %v290 = vld [vmem:[%s236 + $0x1a0] sm:$0xff]
        %v291 = vld [vmem:[%s236 + $0x1a8] sm:$0x3]
        %vm346 = vcmask 1046528
        %v347 = vrot.slane %v238, 1
        %v348 = vrot.slane %v239, 1
        %v349 = vsel %vm346, %v347, %v348
        %v350 = vrot.slane %v240, 1
        %v351 = vsel %vm346, %v348, %v350
        %v352 = vrot.slane %v241, 1
        %v353 = vrot.slane %v242, 1
        %v354 = vsel %vm346, %v352, %v353
        %v355 = vrot.slane %v243, 1
        %v356 = vsel %vm346, %v353, %v355
        %v357 = vrot.slane %v244, 1
        %v358 = vrot.slane %v245, 1
        %v359 = vsel %vm346, %v357, %v358
        %v360 = vrot.slane %v246, 1
        %v361 = vsel %vm346, %v358, %v360
        %v362 = vrot.slane %v247, 1
        %v363 = vrot.slane %v248, 1
        %v364 = vsel %vm346, %v362, %v363
        %v365 = vrot.slane %v249, 1
        %v366 = vsel %vm346, %v363, %v365
        %v367 = vrot.slane %v250, 1
        %v368 = vrot.slane %v251, 1
        %v369 = vsel %vm346, %v367, %v368
        %v370 = vrot.slane %v252, 1
        %v371 = vsel %vm346, %v368, %v370
        %v372 = vrot.slane %v253, 1
        %v373 = vrot.slane %v254, 1
        %v374 = vsel %vm346, %v372, %v373
        %v375 = vrot.slane %v255, 1
        %v376 = vsel %vm346, %v373, %v375
        %v377 = vrot.slane %v256, 1
        %v378 = vrot.slane %v257, 1
        %v379 = vsel %vm346, %v377, %v378
        %v380 = vrot.slane %v258, 1
        %v381 = vsel %vm346, %v378, %v380
        %v382 = vrot.slane %v259, 1
        %v383 = vrot.slane %v260, 1
        %v384 = vsel %vm346, %v382, %v383
        %v385 = vrot.slane %v261, 1
        %v386 = vsel %vm346, %v383, %v385
        %v387 = vrot.slane %v262, 1
        %v388 = vrot.slane %v263, 1
        %v389 = vsel %vm346, %v387, %v388
        %v390 = vrot.slane %v264, 1
        %v391 = vsel %vm346, %v388, %v390
        %v392 = vrot.slane %v265, 1
        %v393 = vrot.slane %v266, 1
        %v394 = vsel %vm346, %v392, %v393
        %v395 = vrot.slane %v267, 1
        %v396 = vsel %vm346, %v393, %v395
        %v397 = vrot.slane %v268, 1
        %v398 = vrot.slane %v269, 1
        %v399 = vsel %vm346, %v397, %v398
        %v400 = vrot.slane %v270, 1
        %v401 = vsel %vm346, %v398, %v400
        %v402 = vrot.slane %v271, 1
        %v403 = vrot.slane %v272, 1
        %v404 = vsel %vm346, %v402, %v403
        %v405 = vrot.slane %v273, 1
        %v406 = vsel %vm346, %v403, %v405
        %v407 = vrot.slane %v274, 1
        %v408 = vrot.slane %v275, 1
        %v409 = vsel %vm346, %v407, %v408
        %v410 = vrot.slane %v276, 1
        %v411 = vsel %vm346, %v408, %v410
        %v412 = vrot.slane %v277, 1
        %v413 = vrot.slane %v278, 1
        %v414 = vsel %vm346, %v412, %v413
        %v415 = vrot.slane %v279, 1
        %v416 = vsel %vm346, %v413, %v415
        %v417 = vrot.slane %v280, 1
        %v418 = vrot.slane %v281, 1
        %v419 = vsel %vm346, %v417, %v418
        %v420 = vrot.slane %v282, 1
        %v421 = vsel %vm346, %v418, %v420
        %v422 = vrot.slane %v283, 1
        %v423 = vrot.slane %v284, 1
        %v424 = vsel %vm346, %v422, %v423
        %v425 = vrot.slane %v285, 1
        %v426 = vsel %vm346, %v423, %v425
        %v427 = vrot.slane %v286, 1
        %v428 = vrot.slane %v287, 1
        %v429 = vsel %vm346, %v427, %v428
        %v430 = vrot.slane %v288, 1
        %v431 = vsel %vm346, %v428, %v430
        %v432 = vrot.slane %v289, 1
        %v433 = vrot.slane %v290, 1
        %v434 = vsel %vm346, %v432, %v433
        %v435 = vrot.slane %v291, 1
        %v436 = vsel %vm346, %v433, %v435
        %437 = vrot.lane.b32.xlu0 %v349, 8
        %v438 = vpop.permute.xlu0 %437
        %439 = vrot.lane.b32.xlu0 %v351, 8
        %v440 = vpop.permute.xlu0 %439
        %441 = vrot.lane.b32.xlu0 %v354, 8
        %v442 = vpop.permute.xlu0 %441
        %443 = vrot.lane.b32.xlu0 %v356, 8
        %v444 = vpop.permute.xlu0 %443
        %445 = vrot.lane.b32.xlu0 %v359, 8
        %v446 = vpop.permute.xlu0 %445
        %447 = vrot.lane.b32.xlu0 %v361, 8
        %v448 = vpop.permute.xlu0 %447
        %449 = vrot.lane.b32.xlu0 %v364, 8
        %v450 = vpop.permute.xlu0 %449
        %451 = vrot.lane.b32.xlu0 %v366, 8
        %v452 = vpop.permute.xlu0 %451
        %453 = vrot.lane.b32.xlu0 %v369, 8
        %v454 = vpop.permute.xlu0 %453
        %455 = vrot.lane.b32.xlu0 %v371, 8
        %v456 = vpop.permute.xlu0 %455
        %457 = vrot.lane.b32.xlu0 %v374, 8
        %v458 = vpop.permute.xlu0 %457
        %459 = vrot.lane.b32.xlu0 %v376, 8
        %v460 = vpop.permute.xlu0 %459
        %461 = vrot.lane.b32.xlu0 %v379, 8
        %v462 = vpop.permute.xlu0 %461
        %463 = vrot.lane.b32.xlu0 %v381, 8
        %v464 = vpop.permute.xlu0 %463
        %465 = vrot.lane.b32.xlu0 %v384, 8
        %v466 = vpop.permute.xlu0 %465
        %467 = vrot.lane.b32.xlu0 %v386, 8
        %v468 = vpop.permute.xlu0 %467
        %469 = vrot.lane.b32.xlu0 %v389, 8
        %v470 = vpop.permute.xlu0 %469
        %471 = vrot.lane.b32.xlu0 %v391, 8
        %v472 = vpop.permute.xlu0 %471
        %473 = vrot.lane.b32.xlu0 %v394, 8
        %v474 = vpop.permute.xlu0 %473
        %475 = vrot.lane.b32.xlu0 %v396, 8
        %v476 = vpop.permute.xlu0 %475
        %477 = vrot.lane.b32.xlu0 %v399, 8
        %v478 = vpop.permute.xlu0 %477
        %479 = vrot.lane.b32.xlu0 %v401, 8
        %v480 = vpop.permute.xlu0 %479
        %481 = vrot.lane.b32.xlu0 %v404, 8
        %v482 = vpop.permute.xlu0 %481
        %483 = vrot.lane.b32.xlu0 %v406, 8
        %v484 = vpop.permute.xlu0 %483
        %485 = vrot.lane.b32.xlu0 %v409, 8
        %v486 = vpop.permute.xlu0 %485
        %487 = vrot.lane.b32.xlu0 %v411, 8
        %v488 = vpop.permute.xlu0 %487
        %489 = vrot.lane.b32.xlu0 %v414, 8
        %v490 = vpop.permute.xlu0 %489
        %491 = vrot.lane.b32.xlu0 %v416, 8
        %v492 = vpop.permute.xlu0 %491
        %493 = vrot.lane.b32.xlu0 %v419, 8
        %v494 = vpop.permute.xlu0 %493
        %495 = vrot.lane.b32.xlu0 %v421, 8
        %v496 = vpop.permute.xlu0 %495
        %497 = vrot.lane.b32.xlu0 %v424, 8
        %v498 = vpop.permute.xlu0 %497
        %499 = vrot.lane.b32.xlu0 %v426, 8
        %v500 = vpop.permute.xlu0 %499
        %501 = vrot.lane.b32.xlu0 %v429, 8
        %v502 = vpop.permute.xlu0 %501
        %503 = vrot.lane.b32.xlu0 %v431, 8
        %v504 = vpop.permute.xlu0 %503
        %505 = vrot.lane.b32.xlu0 %v434, 8
        %v506 = vpop.permute.xlu0 %505
        %507 = vrot.lane.b32.xlu0 %v436, 8
        %v508 = vpop.permute.xlu0 %507
        %vm545 = vcmask 1045504
        %v546 = vrot.slane %v238, 2
        %v547 = vrot.slane %v239, 2
        %v548 = vsel %vm545, %v546, %v547
        %v549 = vrot.slane %v240, 2
        %v550 = vsel %vm545, %v547, %v549
        %v551 = vrot.slane %v241, 2
        %v552 = vrot.slane %v242, 2
        %v553 = vsel %vm545, %v551, %v552
        %v554 = vrot.slane %v243, 2
        %v555 = vsel %vm545, %v552, %v554
        %v556 = vrot.slane %v244, 2
        %v557 = vrot.slane %v245, 2
        %v558 = vsel %vm545, %v556, %v557
        %v559 = vrot.slane %v246, 2
        %v560 = vsel %vm545, %v557, %v559
        %v561 = vrot.slane %v247, 2
        %v562 = vrot.slane %v248, 2
        %v563 = vsel %vm545, %v561, %v562
        %v564 = vrot.slane %v249, 2
        %v565 = vsel %vm545, %v562, %v564
        %v566 = vrot.slane %v250, 2
        %v567 = vrot.slane %v251, 2
        %v568 = vsel %vm545, %v566, %v567
        %v569 = vrot.slane %v252, 2
        %v570 = vsel %vm545, %v567, %v569
        %v571 = vrot.slane %v253, 2
        %v572 = vrot.slane %v254, 2
        %v573 = vsel %vm545, %v571, %v572
        %v574 = vrot.slane %v255, 2
        %v575 = vsel %vm545, %v572, %v574
        %v576 = vrot.slane %v256, 2
        %v577 = vrot.slane %v257, 2
        %v578 = vsel %vm545, %v576, %v577
        %v579 = vrot.slane %v258, 2
        %v580 = vsel %vm545, %v577, %v579
        %v581 = vrot.slane %v259, 2
        %v582 = vrot.slane %v260, 2
        %v583 = vsel %vm545, %v581, %v582
        %v584 = vrot.slane %v261, 2
        %v585 = vsel %vm545, %v582, %v584
        %v586 = vrot.slane %v262, 2
        %v587 = vrot.slane %v263, 2
        %v588 = vsel %vm545, %v586, %v587
        %v589 = vrot.slane %v264, 2
        %v590 = vsel %vm545, %v587, %v589
        %v591 = vrot.slane %v265, 2
        %v592 = vrot.slane %v266, 2
        %v593 = vsel %vm545, %v591, %v592
        %v594 = vrot.slane %v267, 2
        %v595 = vsel %vm545, %v592, %v594
        %v596 = vrot.slane %v268, 2
        %v597 = vrot.slane %v269, 2
        %v598 = vsel %vm545, %v596, %v597
        %v599 = vrot.slane %v270, 2
        %v600 = vsel %vm545, %v597, %v599
        %v601 = vrot.slane %v271, 2
        %v602 = vrot.slane %v272, 2
        %v603 = vsel %vm545, %v601, %v602
        %v604 = vrot.slane %v273, 2
        %v605 = vsel %vm545, %v602, %v604
        %v606 = vrot.slane %v274, 2
        %v607 = vrot.slane %v275, 2
        %v608 = vsel %vm545, %v606, %v607
        %v609 = vrot.slane %v276, 2
        %v610 = vsel %vm545, %v607, %v609
        %v611 = vrot.slane %v277, 2
        %v612 = vrot.slane %v278, 2
        %v613 = vsel %vm545, %v611, %v612
        %v614 = vrot.slane %v279, 2
        %v615 = vsel %vm545, %v612, %v614
        %v616 = vrot.slane %v280, 2
        %v617 = vrot.slane %v281, 2
        %v618 = vsel %vm545, %v616, %v617
        %v619 = vrot.slane %v282, 2
        %v620 = vsel %vm545, %v617, %v619
        %v621 = vrot.slane %v283, 2
        %v622 = vrot.slane %v284, 2
        %v623 = vsel %vm545, %v621, %v622
        %v624 = vrot.slane %v285, 2
        %v625 = vsel %vm545, %v622, %v624
        %v626 = vrot.slane %v286, 2
        %v627 = vrot.slane %v287, 2
        %v628 = vsel %vm545, %v626, %v627
        %v629 = vrot.slane %v288, 2
        %v630 = vsel %vm545, %v627, %v629
        %v631 = vrot.slane %v289, 2
        %v632 = vrot.slane %v290, 2
        %v633 = vsel %vm545, %v631, %v632
        %v634 = vrot.slane %v291, 2
        %v635 = vsel %vm545, %v632, %v634
        %636 = vrot.lane.b32.xlu0 %v548, 16
        %v637 = vpop.permute.xlu0 %636
        %638 = vrot.lane.b32.xlu0 %v550, 16
        %v639 = vpop.permute.xlu0 %638
        %640 = vrot.lane.b32.xlu0 %v553, 16
        %v641 = vpop.permute.xlu0 %640
        %642 = vrot.lane.b32.xlu0 %v555, 16
        %v643 = vpop.permute.xlu0 %642
        %644 = vrot.lane.b32.xlu0 %v558, 16
        %v645 = vpop.permute.xlu0 %644
        %646 = vrot.lane.b32.xlu0 %v560, 16
        %v647 = vpop.permute.xlu0 %646
        %648 = vrot.lane.b32.xlu0 %v563, 16
        %v649 = vpop.permute.xlu0 %648
        %650 = vrot.lane.b32.xlu0 %v565, 16
        %v651 = vpop.permute.xlu0 %650
        %652 = vrot.lane.b32.xlu0 %v568, 16
        %v653 = vpop.permute.xlu0 %652
        %654 = vrot.lane.b32.xlu0 %v570, 16
        %v655 = vpop.permute.xlu0 %654
        %656 = vrot.lane.b32.xlu0 %v573, 16
        %v657 = vpop.permute.xlu0 %656
        %658 = vrot.lane.b32.xlu0 %v575, 16
        %v659 = vpop.permute.xlu0 %658
        %660 = vrot.lane.b32.xlu0 %v578, 16
        %v661 = vpop.permute.xlu0 %660
        %662 = vrot.lane.b32.xlu0 %v580, 16
        %v663 = vpop.permute.xlu0 %662
        %664 = vrot.lane.b32.xlu0 %v583, 16
        %v665 = vpop.permute.xlu0 %664
        %666 = vrot.lane.b32.xlu0 %v585, 16
        %v667 = vpop.permute.xlu0 %666
        %668 = vrot.lane.b32.xlu0 %v588, 16
        %v669 = vpop.permute.xlu0 %668
        %670 = vrot.lane.b32.xlu0 %v590, 16
        %v671 = vpop.permute.xlu0 %670
        %672 = vrot.lane.b32.xlu0 %v593, 16
        %v673 = vpop.permute.xlu0 %672
        %674 = vrot.lane.b32.xlu0 %v595, 16
        %v675 = vpop.permute.xlu0 %674
        %676 = vrot.lane.b32.xlu0 %v598, 16
        %v677 = vpop.permute.xlu0 %676
        %678 = vrot.lane.b32.xlu0 %v600, 16
        %v679 = vpop.permute.xlu0 %678
        %680 = vrot.lane.b32.xlu0 %v603, 16
        %v681 = vpop.permute.xlu0 %680
        %682 = vrot.lane.b32.xlu0 %v605, 16
        %v683 = vpop.permute.xlu0 %682
        %684 = vrot.lane.b32.xlu0 %v608, 16
        %v685 = vpop.permute.xlu0 %684
        %686 = vrot.lane.b32.xlu0 %v610, 16
        %v687 = vpop.permute.xlu0 %686
        %688 = vrot.lane.b32.xlu0 %v613, 16
        %v689 = vpop.permute.xlu0 %688
        %690 = vrot.lane.b32.xlu0 %v615, 16
        %v691 = vpop.permute.xlu0 %690
        %692 = vrot.lane.b32.xlu0 %v618, 16
        %v693 = vpop.permute.xlu0 %692
        %694 = vrot.lane.b32.xlu0 %v620, 16
        %v695 = vpop.permute.xlu0 %694
        %696 = vrot.lane.b32.xlu0 %v623, 16
        %v697 = vpop.permute.xlu0 %696
        %698 = vrot.lane.b32.xlu0 %v625, 16
        %v699 = vpop.permute.xlu0 %698
        %700 = vrot.lane.b32.xlu0 %v628, 16
        %v701 = vpop.permute.xlu0 %700
        %702 = vrot.lane.b32.xlu0 %v630, 16
        %v703 = vpop.permute.xlu0 %702
        %704 = vrot.lane.b32.xlu0 %v633, 16
        %v705 = vpop.permute.xlu0 %704
        %706 = vrot.lane.b32.xlu0 %v635, 16
        %v707 = vpop.permute.xlu0 %706
        %vm744 = vcmask 64512
        %v745 = vsel %vm744, %v238, %v438
        %v746 = vsel %vm744, %v239, %v440
        %v747 = vsel %vm744, %v241, %v442
        %v748 = vsel %vm744, %v242, %v444
        %v749 = vsel %vm744, %v244, %v446
        %v750 = vsel %vm744, %v245, %v448
        %v751 = vsel %vm744, %v247, %v450
        %v752 = vsel %vm744, %v248, %v452
        %v753 = vsel %vm744, %v250, %v454
        %v754 = vsel %vm744, %v251, %v456
        %v755 = vsel %vm744, %v253, %v458
        %v756 = vsel %vm744, %v254, %v460
        %v757 = vsel %vm744, %v256, %v462
        %v758 = vsel %vm744, %v257, %v464
        %v759 = vsel %vm744, %v259, %v466
        %v760 = vsel %vm744, %v260, %v468
        %v761 = vsel %vm744, %v262, %v470
        %v762 = vsel %vm744, %v263, %v472
        %v763 = vsel %vm744, %v265, %v474
        %v764 = vsel %vm744, %v266, %v476
        %v765 = vsel %vm744, %v268, %v478
        %v766 = vsel %vm744, %v269, %v480
        %v767 = vsel %vm744, %v271, %v482
        %v768 = vsel %vm744, %v272, %v484
        %v769 = vsel %vm744, %v274, %v486
        %v770 = vsel %vm744, %v275, %v488
        %v771 = vsel %vm744, %v277, %v490
        %v772 = vsel %vm744, %v278, %v492
        %v773 = vsel %vm744, %v280, %v494
        %v774 = vsel %vm744, %v281, %v496
        %v775 = vsel %vm744, %v283, %v498
        %v776 = vsel %vm744, %v284, %v500
        %v777 = vsel %vm744, %v286, %v502
        %v778 = vsel %vm744, %v287, %v504
        %v779 = vsel %vm744, %v289, %v506
        %v780 = vsel %vm744, %v290, %v508
        %vm781 = vcmask 130048
        %v782 = vsel %vm781, %v745, %v637
        %v783 = vsel %vm781, %v746, %v639
        %v784 = vsel %vm781, %v747, %v641
        %v785 = vsel %vm781, %v748, %v643
        %v786 = vsel %vm781, %v749, %v645
        %v787 = vsel %vm781, %v750, %v647
        %v788 = vsel %vm781, %v751, %v649
        %v789 = vsel %vm781, %v752, %v651
        %v790 = vsel %vm781, %v753, %v653
        %v791 = vsel %vm781, %v754, %v655
        %v792 = vsel %vm781, %v755, %v657
        %v793 = vsel %vm781, %v756, %v659
        %v794 = vsel %vm781, %v757, %v661
        %v795 = vsel %vm781, %v758, %v663
        %v796 = vsel %vm781, %v759, %v665
        %v797 = vsel %vm781, %v760, %v667
        %v798 = vsel %vm781, %v761, %v669
        %v799 = vsel %vm781, %v762, %v671
        %v800 = vsel %vm781, %v763, %v673
        %v801 = vsel %vm781, %v764, %v675
        %v802 = vsel %vm781, %v765, %v677
        %v803 = vsel %vm781, %v766, %v679
        %v804 = vsel %vm781, %v767, %v681
        %v805 = vsel %vm781, %v768, %v683
        %v806 = vsel %vm781, %v769, %v685
        %v807 = vsel %vm781, %v770, %v687
        %v808 = vsel %vm781, %v771, %v689
        %v809 = vsel %vm781, %v772, %v691
        %v810 = vsel %vm781, %v773, %v693
        %v811 = vsel %vm781, %v774, %v695
        %v812 = vsel %vm781, %v775, %v697
        %v813 = vsel %vm781, %v776, %v699
        %v814 = vsel %vm781, %v777, %v701
        %v815 = vsel %vm781, %v778, %v703
        %v816 = vsel %vm781, %v779, %v705
        %v817 = vsel %vm781, %v780, %v707
        %v818 = vld [vmem:[%s1] sm:$0xff]
        %v819 = vld [vmem:[%s1 + $0x8] sm:$0xff]
        %v820 = vld [vmem:[%s1 + $0x10] sm:$0xff]
        %s821 = scalar_lea.vmem %s1, 24
        %v822 = vld [vmem:[%s821] sm:$0xff]
        %v823 = vld [vmem:[%s821 + $0x8] sm:$0xff]
        %v824 = vld [vmem:[%s821 + $0x10] sm:$0xff]
        %vm825 = vcmask 195584
        %v827 = vsel %vm825, %v784, 0
        %v830 = vsel %vm825, %v785, 0
        %v833 = vsel %vm825, %v786, 0
        %v836 = vsel %vm825, %v787, 0
        %v839 = vsel %vm825, %v788, 0
        %v842 = vsel %vm825, %v789, 0
        %v845 = vsel %vm825, %v790, 0
        %v848 = vsel %vm825, %v791, 0
        %v851 = vsel %vm825, %v792, 0
        %v854 = vsel %vm825, %v793, 0
        %v857 = vsel %vm825, %v794, 0
        %v860 = vsel %vm825, %v795, 0
        %v863 = vsel %vm825, %v796, 0
        %v866 = vsel %vm825, %v797, 0
        %v869 = vsel %vm825, %v798, 0
        %v872 = vsel %vm825, %v799, 0
        %v875 = vsel %vm825, %v800, 0
        %v878 = vsel %vm825, %v801, 0
        %v881 = vsel %vm825, %v802, 0
        %v884 = vsel %vm825, %v803, 0
        %v887 = vsel %vm825, %v804, 0
        %v890 = vsel %vm825, %v805, 0
        %v893 = vsel %vm825, %v806, 0
        %v896 = vsel %vm825, %v807, 0
        %v899 = vsel %vm825, %v808, 0
        %v902 = vsel %vm825, %v809, 0
        %v905 = vsel %vm825, %v810, 0
        %v908 = vsel %vm825, %v811, 0
        %v911 = vsel %vm825, %v812, 0
        %v914 = vsel %vm825, %v813, 0
        %v917 = vsel %vm825, %v814, 0
        %v920 = vsel %vm825, %v815, 0
        %922 = vmatprep.subr.mxu0 0.0
        %923 = vmatpush1.msra.mxu0 0.0
        %924 = vmatprep.subr.mxu0 0.0
        %925 = vmatpush1.msra.mxu0 0.0
        %926 = vmatprep.subr.mxu0 0.0
        %927 = vmatpush1.msra.mxu0 0.0
        %928 = vmatprep.subr.mxu0 0.0
        %929 = vmatpush1.msra.mxu0 0.0
        %930 = vmatprep.subr.mxu0 0.0
        %931 = vmatpush1.msra.mxu0 0.0
        %932 = vmatprep.subr.mxu0 0.0
        %933 = vmatpush1.msra.mxu0 0.0
        %934 = vmatprep.subr.mxu0 0.0
        %935 = vmatpush1.msra.mxu0 0.0
        %936 = vmatprep.subr.mxu0 0.0
        %937 = vmatpush1.msra.mxu0 0.0
        %938 = vmatprep.subr.mxu0 0.0
        %939 = vmatpush1.msra.mxu0 0.0
        %940 = vmatprep.subr.mxu0 0.0
        %941 = vmatpush1.msra.mxu0 0.0
        %942 = vmatprep.subr.mxu0 0.0
        %943 = vmatpush1.msra.mxu0 0.0
        %944 = vmatprep.subr.mxu0 0.0
        %945 = vmatpush1.msra.mxu0 0.0
        %946 = vmatprep.subr.mxu0 0.0
        %947 = vmatpush1.msra.mxu0 0.0
        %948 = vmatprep.subr.mxu0 0.0
        %949 = vmatpush1.msra.mxu0 %v824
        %950 = vmatprep.subr.mxu0 0.0
        %951 = vmatpush1.msra.mxu0 %v823
        %952 = vmatprep.subr.mxu0 0.0
        %953 = vmatpush1.msra.mxu0 %v822
        %954 = vmatprep.subr.mxu0 0.0
        %955 = vmatpush2.msra.mxu0 0.0
        %956 = vmatprep.subr.mxu0 0.0
        %957 = vmatpush2.msra.mxu0 0.0
        %958 = vmatprep.subr.mxu0 0.0
        %959 = vmatpush2.msra.mxu0 0.0
        %960 = vmatprep.subr.mxu0 0.0
        %961 = vmatpush2.msra.mxu0 0.0
        %962 = vmatprep.subr.mxu0 0.0
        %963 = vmatpush2.msra.mxu0 0.0
        %964 = vmatprep.subr.mxu0 0.0
        %965 = vmatpush2.msra.mxu0 0.0
        %966 = vmatprep.subr.mxu0 0.0
        %967 = vmatpush2.msra.mxu0 0.0
        %968 = vmatprep.subr.mxu0 0.0
        %969 = vmatpush2.msra.mxu0 0.0
        %970 = vmatprep.subr.mxu0 0.0
        %971 = vmatpush2.msra.mxu0 0.0
        %972 = vmatprep.subr.mxu0 0.0
        %973 = vmatpush2.msra.mxu0 0.0
        %974 = vmatprep.subr.mxu0 0.0
        %975 = vmatpush2.msra.mxu0 0.0
        %976 = vmatprep.subr.mxu0 0.0
        %977 = vmatpush2.msra.mxu0 0.0
        %978 = vmatprep.subr.mxu0 0.0
        %979 = vmatpush2.msra.mxu0 0.0
        %980 = vmatprep.subr.mxu0 0.0
        %981 = vmatpush2.msra.mxu0 0.0
        %982 = vmatprep.subr.mxu0 0.0
        %983 = vmatpush2.msra.mxu0 0.0
        %984 = vmatprep.subr.mxu0 0.0
        %985 = vmatpush2.msra.mxu0 0.0
        %986 = vmatprep.mubr.f32.mxu0 0.0
        %987 = vmatmul.mubr.f32.gmra.mxu0 %v827
        %v988 = vpop.f32.mrf.mxu0
        %v989 = vadd.f32 0.0, %v988
        %v990 = vpop.f32.mrf.mxu0
        %991 = vmatprep.mubr.f32.mxu0 0.0
        %992 = vmatmul.mubr.f32.gmra.mxu0 %v830
        %v993 = vpop.f32.mrf.mxu0
        %v994 = vadd.f32 0.0, %v993
        %v995 = vpop.f32.mrf.mxu0
        %996 = vmatprep.mubr.f32.mxu0 0.0
        %997 = vmatmul.mubr.f32.gmra.mxu0 %v833
        %v998 = vpop.f32.mrf.mxu0
        %v999 = vadd.f32 0.0, %v998
        %v1000 = vpop.f32.mrf.mxu0
        %1001 = vmatprep.mubr.f32.mxu0 0.0
        %1002 = vmatmul.mubr.f32.gmra.mxu0 %v836
        %v1003 = vpop.f32.mrf.mxu0
        %v1004 = vadd.f32 0.0, %v1003
        %v1005 = vpop.f32.mrf.mxu0
        %1006 = vmatprep.mubr.f32.mxu0 0.0
        %1007 = vmatmul.mubr.f32.gmra.mxu0 %v839
        %v1008 = vpop.f32.mrf.mxu0
        %v1009 = vadd.f32 0.0, %v1008
        %v1010 = vpop.f32.mrf.mxu0
        %1011 = vmatprep.mubr.f32.mxu0 0.0
        %1012 = vmatmul.mubr.f32.gmra.mxu0 %v842
        %v1013 = vpop.f32.mrf.mxu0
        %v1014 = vadd.f32 0.0, %v1013
        %v1015 = vpop.f32.mrf.mxu0
        %1016 = vmatprep.mubr.f32.mxu0 0.0
        %1017 = vmatmul.mubr.f32.gmra.mxu0 %v845
        %v1018 = vpop.f32.mrf.mxu0
        %v1019 = vadd.f32 0.0, %v1018
        %v1020 = vpop.f32.mrf.mxu0
        %1021 = vmatprep.mubr.f32.mxu0 0.0
        %1022 = vmatmul.mubr.f32.gmra.mxu0 %v848
        %v1023 = vpop.f32.mrf.mxu0
        %v1024 = vadd.f32 0.0, %v1023
        %v1025 = vpop.f32.mrf.mxu0
        %1026 = vmatprep.mubr.f32.mxu0 0.0
        %1027 = vmatmul.mubr.f32.gmra.mxu0 %v851
        %v1028 = vpop.f32.mrf.mxu0
        %v1029 = vadd.f32 0.0, %v1028
        %v1030 = vpop.f32.mrf.mxu0
        %1031 = vmatprep.mubr.f32.mxu0 0.0
        %1032 = vmatmul.mubr.f32.gmra.mxu0 %v854
        %v1033 = vpop.f32.mrf.mxu0
        %v1034 = vadd.f32 0.0, %v1033
        %v1035 = vpop.f32.mrf.mxu0
        %1036 = vmatprep.mubr.f32.mxu0 0.0
        %1037 = vmatmul.mubr.f32.gmra.mxu0 %v857
        %v1038 = vpop.f32.mrf.mxu0
        %v1039 = vadd.f32 0.0, %v1038
        %v1040 = vpop.f32.mrf.mxu0
        %1041 = vmatprep.mubr.f32.mxu0 0.0
        %1042 = vmatmul.mubr.f32.gmra.mxu0 %v860
        %v1043 = vpop.f32.mrf.mxu0
        %v1044 = vadd.f32 0.0, %v1043
        %v1045 = vpop.f32.mrf.mxu0
        %1046 = vmatprep.mubr.f32.mxu0 0.0
        %1047 = vmatmul.mubr.f32.gmra.mxu0 %v863
        %v1048 = vpop.f32.mrf.mxu0
        %v1049 = vadd.f32 0.0, %v1048
        %v1050 = vpop.f32.mrf.mxu0
        %1051 = vmatprep.mubr.f32.mxu0 0.0
        %1052 = vmatmul.mubr.f32.gmra.mxu0 %v866
        %v1053 = vpop.f32.mrf.mxu0
        %v1054 = vadd.f32 0.0, %v1053
        %v1055 = vpop.f32.mrf.mxu0
        %1056 = vmatprep.mubr.f32.mxu0 0.0
        %1057 = vmatmul.mubr.f32.gmra.mxu0 %v869
        %v1058 = vpop.f32.mrf.mxu0
        %v1059 = vadd.f32 0.0, %v1058
        %v1060 = vpop.f32.mrf.mxu0
        %1061 = vmatprep.mubr.f32.mxu0 0.0
        %1062 = vmatmul.mubr.f32.gmra.mxu0 %v872
        %v1063 = vpop.f32.mrf.mxu0
        %v1064 = vadd.f32 0.0, %v1063
        %v1065 = vpop.f32.mrf.mxu0
        %1066 = vmatprep.mubr.f32.mxu0 0.0
        %1067 = vmatmul.mubr.f32.gmra.mxu0 %v875
        %v1068 = vpop.f32.mrf.mxu0
        %v1069 = vadd.f32 0.0, %v1068
        %v1070 = vpop.f32.mrf.mxu0
        %1071 = vmatprep.mubr.f32.mxu0 0.0
        %1072 = vmatmul.mubr.f32.gmra.mxu0 %v878
        %v1073 = vpop.f32.mrf.mxu0
        %v1074 = vadd.f32 0.0, %v1073
        %v1075 = vpop.f32.mrf.mxu0
        %1076 = vmatprep.mubr.f32.mxu0 0.0
        %1077 = vmatmul.mubr.f32.gmra.mxu0 %v881
        %v1078 = vpop.f32.mrf.mxu0
        %v1079 = vadd.f32 0.0, %v1078
        %v1080 = vpop.f32.mrf.mxu0
        %1081 = vmatprep.mubr.f32.mxu0 0.0
        %1082 = vmatmul.mubr.f32.gmra.mxu0 %v884
        %v1083 = vpop.f32.mrf.mxu0
        %v1084 = vadd.f32 0.0, %v1083
        %v1085 = vpop.f32.mrf.mxu0
        %1086 = vmatprep.mubr.f32.mxu0 0.0
        %1087 = vmatmul.mubr.f32.gmra.mxu0 %v887
        %v1088 = vpop.f32.mrf.mxu0
        %v1089 = vadd.f32 0.0, %v1088
        %v1090 = vpop.f32.mrf.mxu0
        %1091 = vmatprep.mubr.f32.mxu0 0.0
        %1092 = vmatmul.mubr.f32.gmra.mxu0 %v890
        %v1093 = vpop.f32.mrf.mxu0
        %v1094 = vadd.f32 0.0, %v1093
        %v1095 = vpop.f32.mrf.mxu0
        %1096 = vmatprep.mubr.f32.mxu0 0.0
        %1097 = vmatmul.mubr.f32.gmra.mxu0 %v893
        %v1098 = vpop.f32.mrf.mxu0
        %v1099 = vadd.f32 0.0, %v1098
        %v1100 = vpop.f32.mrf.mxu0
        %1101 = vmatprep.mubr.f32.mxu0 0.0
        %1102 = vmatmul.mubr.f32.gmra.mxu0 %v896
        %v1103 = vpop.f32.mrf.mxu0
        %v1104 = vadd.f32 0.0, %v1103
        %v1105 = vpop.f32.mrf.mxu0
        %1106 = vmatprep.mubr.f32.mxu0 0.0
        %1107 = vmatmul.mubr.f32.gmra.mxu0 %v899
        %v1108 = vpop.f32.mrf.mxu0
        %v1109 = vadd.f32 0.0, %v1108
        %v1110 = vpop.f32.mrf.mxu0
        %1111 = vmatprep.mubr.f32.mxu0 0.0
        %1112 = vmatmul.mubr.f32.gmra.mxu0 %v902
        %v1113 = vpop.f32.mrf.mxu0
        %v1114 = vadd.f32 0.0, %v1113
        %v1115 = vpop.f32.mrf.mxu0
        %1116 = vmatprep.mubr.f32.mxu0 0.0
        %1117 = vmatmul.mubr.f32.gmra.mxu0 %v905
        %v1118 = vpop.f32.mrf.mxu0
        %v1119 = vadd.f32 0.0, %v1118
        %v1120 = vpop.f32.mrf.mxu0
        %1121 = vmatprep.mubr.f32.mxu0 0.0
        %1122 = vmatmul.mubr.f32.gmra.mxu0 %v908
        %v1123 = vpop.f32.mrf.mxu0
        %v1124 = vadd.f32 0.0, %v1123
        %v1125 = vpop.f32.mrf.mxu0
        %1126 = vmatprep.mubr.f32.mxu0 0.0
        %1127 = vmatmul.mubr.f32.gmra.mxu0 %v911
        %v1128 = vpop.f32.mrf.mxu0
        %v1129 = vadd.f32 0.0, %v1128
        %v1130 = vpop.f32.mrf.mxu0
        %1131 = vmatprep.mubr.f32.mxu0 0.0
        %1132 = vmatmul.mubr.f32.gmra.mxu0 %v914
        %v1133 = vpop.f32.mrf.mxu0
        %v1134 = vadd.f32 0.0, %v1133
        %v1135 = vpop.f32.mrf.mxu0
        %1136 = vmatprep.mubr.f32.mxu0 0.0
        %1137 = vmatmul.mubr.f32.gmra.mxu0 %v917
        %v1138 = vpop.f32.mrf.mxu0
        %v1139 = vadd.f32 0.0, %v1138
        %v1140 = vpop.f32.mrf.mxu0
        %1141 = vmatprep.mubr.f32.mxu0 0.0
        %1142 = vmatmul.mubr.f32.gmra.mxu0 %v920
        %v1143 = vpop.f32.mrf.mxu0
        %v1144 = vadd.f32 0.0, %v1143
        %v1145 = vpop.f32.mrf.mxu0
        %1146 = vdwg.mxu0
        %v1148 = vsel %vm825, %v782, 0
        %v1151 = vsel %vm825, %v783, 0
        %1153 = vmatprep.subr.mxu0 0.0
        %1154 = vmatpush1.msra.mxu0 0.0
        %1155 = vmatprep.subr.mxu0 0.0
        %1156 = vmatpush1.msra.mxu0 0.0
        %1157 = vmatprep.subr.mxu0 0.0
        %1158 = vmatpush1.msra.mxu0 0.0
        %1159 = vmatprep.subr.mxu0 0.0
        %1160 = vmatpush1.msra.mxu0 0.0
        %1161 = vmatprep.subr.mxu0 0.0
        %1162 = vmatpush1.msra.mxu0 0.0
        %1163 = vmatprep.subr.mxu0 0.0
        %1164 = vmatpush1.msra.mxu0 0.0
        %1165 = vmatprep.subr.mxu0 0.0
        %1166 = vmatpush1.msra.mxu0 0.0
        %1167 = vmatprep.subr.mxu0 0.0
        %1168 = vmatpush1.msra.mxu0 0.0
        %1169 = vmatprep.subr.mxu0 0.0
        %1170 = vmatpush1.msra.mxu0 0.0
        %1171 = vmatprep.subr.mxu0 0.0
        %1172 = vmatpush1.msra.mxu0 0.0
        %1173 = vmatprep.subr.mxu0 0.0
        %1174 = vmatpush1.msra.mxu0 0.0
        %1175 = vmatprep.subr.mxu0 0.0
        %1176 = vmatpush1.msra.mxu0 0.0
        %1177 = vmatprep.subr.mxu0 0.0
        %1178 = vmatpush1.msra.mxu0 0.0
        %1179 = vmatprep.subr.mxu0 0.0
        %1180 = vmatpush1.msra.mxu0 %v820
        %1181 = vmatprep.subr.mxu0 0.0
        %1182 = vmatpush1.msra.mxu0 %v819
        %1183 = vmatprep.subr.mxu0 0.0
        %1184 = vmatpush1.msra.mxu0 %v818
        %1185 = vmatprep.subr.mxu0 0.0
        %1186 = vmatpush2.msra.mxu0 0.0
        %1187 = vmatprep.subr.mxu0 0.0
        %1188 = vmatpush2.msra.mxu0 0.0
        %1189 = vmatprep.subr.mxu0 0.0
        %1190 = vmatpush2.msra.mxu0 0.0
        %1191 = vmatprep.subr.mxu0 0.0
        %1192 = vmatpush2.msra.mxu0 0.0
        %1193 = vmatprep.subr.mxu0 0.0
        %1194 = vmatpush2.msra.mxu0 0.0
        %1195 = vmatprep.subr.mxu0 0.0
        %1196 = vmatpush2.msra.mxu0 0.0
        %1197 = vmatprep.subr.mxu0 0.0
        %1198 = vmatpush2.msra.mxu0 0.0
        %1199 = vmatprep.subr.mxu0 0.0
        %1200 = vmatpush2.msra.mxu0 0.0
        %1201 = vmatprep.subr.mxu0 0.0
        %1202 = vmatpush2.msra.mxu0 0.0
        %1203 = vmatprep.subr.mxu0 0.0
        %1204 = vmatpush2.msra.mxu0 0.0
        %1205 = vmatprep.subr.mxu0 0.0
        %1206 = vmatpush2.msra.mxu0 0.0
        %1207 = vmatprep.subr.mxu0 0.0
        %1208 = vmatpush2.msra.mxu0 0.0
        %1209 = vmatprep.subr.mxu0 0.0
        %1210 = vmatpush2.msra.mxu0 0.0
        %1211 = vmatprep.subr.mxu0 0.0
        %1212 = vmatpush2.msra.mxu0 0.0
        %1213 = vmatprep.subr.mxu0 0.0
        %1214 = vmatpush2.msra.mxu0 0.0
        %1215 = vmatprep.subr.mxu0 0.0
        %1216 = vmatpush2.msra.mxu0 0.0
        %1217 = vmatprep.mubr.f32.mxu0 0.0
        %1218 = vmatmul.mubr.f32.gmra.mxu0 %v1148
        %v1219 = vpop.f32.mrf.mxu0
        %v1220 = vadd.f32 %v989, %v1219
        %v1221 = vpop.f32.mrf.mxu0
        %1222 = vmatprep.mubr.f32.mxu0 0.0
        %1223 = vmatmul.mubr.f32.gmra.mxu0 %v1151
        %v1224 = vpop.f32.mrf.mxu0
        %v1225 = vadd.f32 %v994, %v1224
        %v1226 = vpop.f32.mrf.mxu0
        %1227 = vmatprep.mubr.f32.mxu0 0.0
        %1228 = vmatmul.mubr.f32.gmra.mxu0 %v827
        %v1229 = vpop.f32.mrf.mxu0
        %v1230 = vadd.f32 %v999, %v1229
        %v1231 = vpop.f32.mrf.mxu0
        %1232 = vmatprep.mubr.f32.mxu0 0.0
        %1233 = vmatmul.mubr.f32.gmra.mxu0 %v830
        %v1234 = vpop.f32.mrf.mxu0
        %v1235 = vadd.f32 %v1004, %v1234
        %v1236 = vpop.f32.mrf.mxu0
        %1237 = vmatprep.mubr.f32.mxu0 0.0
        %1238 = vmatmul.mubr.f32.gmra.mxu0 %v833
        %v1239 = vpop.f32.mrf.mxu0
        %v1240 = vadd.f32 %v1009, %v1239
        %v1241 = vpop.f32.mrf.mxu0
        %1242 = vmatprep.mubr.f32.mxu0 0.0
        %1243 = vmatmul.mubr.f32.gmra.mxu0 %v836
        %v1244 = vpop.f32.mrf.mxu0
        %v1245 = vadd.f32 %v1014, %v1244
        %v1246 = vpop.f32.mrf.mxu0
        %1247 = vmatprep.mubr.f32.mxu0 0.0
        %1248 = vmatmul.mubr.f32.gmra.mxu0 %v839
        %v1249 = vpop.f32.mrf.mxu0
        %v1250 = vadd.f32 %v1019, %v1249
        %v1251 = vpop.f32.mrf.mxu0
        %1252 = vmatprep.mubr.f32.mxu0 0.0
        %1253 = vmatmul.mubr.f32.gmra.mxu0 %v842
        %v1254 = vpop.f32.mrf.mxu0
        %v1255 = vadd.f32 %v1024, %v1254
        %v1256 = vpop.f32.mrf.mxu0
        %1257 = vmatprep.mubr.f32.mxu0 0.0
        %1258 = vmatmul.mubr.f32.gmra.mxu0 %v845
        %v1259 = vpop.f32.mrf.mxu0
        %v1260 = vadd.f32 %v1029, %v1259
        %v1261 = vpop.f32.mrf.mxu0
        %1262 = vmatprep.mubr.f32.mxu0 0.0
        %1263 = vmatmul.mubr.f32.gmra.mxu0 %v848
        %v1264 = vpop.f32.mrf.mxu0
        %v1265 = vadd.f32 %v1034, %v1264
        %v1266 = vpop.f32.mrf.mxu0
        %1267 = vmatprep.mubr.f32.mxu0 0.0
        %1268 = vmatmul.mubr.f32.gmra.mxu0 %v851
        %v1269 = vpop.f32.mrf.mxu0
        %v1270 = vadd.f32 %v1039, %v1269
        %v1271 = vpop.f32.mrf.mxu0
        %1272 = vmatprep.mubr.f32.mxu0 0.0
        %1273 = vmatmul.mubr.f32.gmra.mxu0 %v854
        %v1274 = vpop.f32.mrf.mxu0
        %v1275 = vadd.f32 %v1044, %v1274
        %v1276 = vpop.f32.mrf.mxu0
        %1277 = vmatprep.mubr.f32.mxu0 0.0
        %1278 = vmatmul.mubr.f32.gmra.mxu0 %v857
        %v1279 = vpop.f32.mrf.mxu0
        %v1280 = vadd.f32 %v1049, %v1279
        %v1281 = vpop.f32.mrf.mxu0
        %1282 = vmatprep.mubr.f32.mxu0 0.0
        %1283 = vmatmul.mubr.f32.gmra.mxu0 %v860
        %v1284 = vpop.f32.mrf.mxu0
        %v1285 = vadd.f32 %v1054, %v1284
        %v1286 = vpop.f32.mrf.mxu0
        %1287 = vmatprep.mubr.f32.mxu0 0.0
        %1288 = vmatmul.mubr.f32.gmra.mxu0 %v863
        %v1289 = vpop.f32.mrf.mxu0
        %v1290 = vadd.f32 %v1059, %v1289
        %v1291 = vpop.f32.mrf.mxu0
        %1292 = vmatprep.mubr.f32.mxu0 0.0
        %1293 = vmatmul.mubr.f32.gmra.mxu0 %v866
        %v1294 = vpop.f32.mrf.mxu0
        %v1295 = vadd.f32 %v1064, %v1294
        %v1296 = vpop.f32.mrf.mxu0
        %1297 = vmatprep.mubr.f32.mxu0 0.0
        %1298 = vmatmul.mubr.f32.gmra.mxu0 %v869
        %v1299 = vpop.f32.mrf.mxu0
        %v1300 = vadd.f32 %v1069, %v1299
        %v1301 = vpop.f32.mrf.mxu0
        %1302 = vmatprep.mubr.f32.mxu0 0.0
        %1303 = vmatmul.mubr.f32.gmra.mxu0 %v872
        %v1304 = vpop.f32.mrf.mxu0
        %v1305 = vadd.f32 %v1074, %v1304
        %v1306 = vpop.f32.mrf.mxu0
        %1307 = vmatprep.mubr.f32.mxu0 0.0
        %1308 = vmatmul.mubr.f32.gmra.mxu0 %v875
        %v1309 = vpop.f32.mrf.mxu0
        %v1310 = vadd.f32 %v1079, %v1309
        %v1311 = vpop.f32.mrf.mxu0
        %1312 = vmatprep.mubr.f32.mxu0 0.0
        %1313 = vmatmul.mubr.f32.gmra.mxu0 %v878
        %v1314 = vpop.f32.mrf.mxu0
        %v1315 = vadd.f32 %v1084, %v1314
        %v1316 = vpop.f32.mrf.mxu0
        %1317 = vmatprep.mubr.f32.mxu0 0.0
        %1318 = vmatmul.mubr.f32.gmra.mxu0 %v881
        %v1319 = vpop.f32.mrf.mxu0
        %v1320 = vadd.f32 %v1089, %v1319
        %v1321 = vpop.f32.mrf.mxu0
        %1322 = vmatprep.mubr.f32.mxu0 0.0
        %1323 = vmatmul.mubr.f32.gmra.mxu0 %v884
        %v1324 = vpop.f32.mrf.mxu0
        %v1325 = vadd.f32 %v1094, %v1324
        %v1326 = vpop.f32.mrf.mxu0
        %1327 = vmatprep.mubr.f32.mxu0 0.0
        %1328 = vmatmul.mubr.f32.gmra.mxu0 %v887
        %v1329 = vpop.f32.mrf.mxu0
        %v1330 = vadd.f32 %v1099, %v1329
        %v1331 = vpop.f32.mrf.mxu0
        %1332 = vmatprep.mubr.f32.mxu0 0.0
        %1333 = vmatmul.mubr.f32.gmra.mxu0 %v890
        %v1334 = vpop.f32.mrf.mxu0
        %v1335 = vadd.f32 %v1104, %v1334
        %v1336 = vpop.f32.mrf.mxu0
        %1337 = vmatprep.mubr.f32.mxu0 0.0
        %1338 = vmatmul.mubr.f32.gmra.mxu0 %v893
        %v1339 = vpop.f32.mrf.mxu0
        %v1340 = vadd.f32 %v1109, %v1339
        %v1341 = vpop.f32.mrf.mxu0
        %1342 = vmatprep.mubr.f32.mxu0 0.0
        %1343 = vmatmul.mubr.f32.gmra.mxu0 %v896
        %v1344 = vpop.f32.mrf.mxu0
        %v1345 = vadd.f32 %v1114, %v1344
        %v1346 = vpop.f32.mrf.mxu0
        %1347 = vmatprep.mubr.f32.mxu0 0.0
        %1348 = vmatmul.mubr.f32.gmra.mxu0 %v899
        %v1349 = vpop.f32.mrf.mxu0
        %v1350 = vadd.f32 %v1119, %v1349
        %v1351 = vpop.f32.mrf.mxu0
        %1352 = vmatprep.mubr.f32.mxu0 0.0
        %1353 = vmatmul.mubr.f32.gmra.mxu0 %v902
        %v1354 = vpop.f32.mrf.mxu0
        %v1355 = vadd.f32 %v1124, %v1354
        %v1356 = vpop.f32.mrf.mxu0
        %1357 = vmatprep.mubr.f32.mxu0 0.0
        %1358 = vmatmul.mubr.f32.gmra.mxu0 %v905
        %v1359 = vpop.f32.mrf.mxu0
        %v1360 = vadd.f32 %v1129, %v1359
        %v1361 = vpop.f32.mrf.mxu0
        %1362 = vmatprep.mubr.f32.mxu0 0.0
        %1363 = vmatmul.mubr.f32.gmra.mxu0 %v908
        %v1364 = vpop.f32.mrf.mxu0
        %v1365 = vadd.f32 %v1134, %v1364
        %v1366 = vpop.f32.mrf.mxu0
        %1367 = vmatprep.mubr.f32.mxu0 0.0
        %1368 = vmatmul.mubr.f32.gmra.mxu0 %v911
        %v1369 = vpop.f32.mrf.mxu0
        %v1370 = vadd.f32 %v1139, %v1369
        %v1371 = vpop.f32.mrf.mxu0
        %1372 = vmatprep.mubr.f32.mxu0 0.0
        %1373 = vmatmul.mubr.f32.gmra.mxu0 %v914
        %v1374 = vpop.f32.mrf.mxu0
        %v1375 = vadd.f32 %v1144, %v1374
        %v1376 = vpop.f32.mrf.mxu0
        %1377 = vdwg.mxu0
        %s1378 = scalar_lea.vmem %s1, 48
        %v1379 = vld [vmem:[%s1378] sm:$0xff]
        %v1380 = vld [vmem:[%s1378 + $0x8] sm:$0xff]
        %v1381 = vld [vmem:[%s1378 + $0x10] sm:$0xff]
        %v1383 = vsel %vm825, %v816, 0
        %v1386 = vsel %vm825, %v817, 0
        %1388 = vmatprep.subr.mxu0 0.0
        %1389 = vmatpush1.msra.mxu0 0.0
        %1390 = vmatprep.subr.mxu0 0.0
        %1391 = vmatpush1.msra.mxu0 0.0
        %1392 = vmatprep.subr.mxu0 0.0
        %1393 = vmatpush1.msra.mxu0 0.0
        %1394 = vmatprep.subr.mxu0 0.0
        %1395 = vmatpush1.msra.mxu0 0.0
        %1396 = vmatprep.subr.mxu0 0.0
        %1397 = vmatpush1.msra.mxu0 0.0
        %1398 = vmatprep.subr.mxu0 0.0
        %1399 = vmatpush1.msra.mxu0 0.0
        %1400 = vmatprep.subr.mxu0 0.0
        %1401 = vmatpush1.msra.mxu0 0.0
        %1402 = vmatprep.subr.mxu0 0.0
        %1403 = vmatpush1.msra.mxu0 0.0
        %1404 = vmatprep.subr.mxu0 0.0
        %1405 = vmatpush1.msra.mxu0 0.0
        %1406 = vmatprep.subr.mxu0 0.0
        %1407 = vmatpush1.msra.mxu0 0.0
        %1408 = vmatprep.subr.mxu0 0.0
        %1409 = vmatpush1.msra.mxu0 0.0
        %1410 = vmatprep.subr.mxu0 0.0
        %1411 = vmatpush1.msra.mxu0 0.0
        %1412 = vmatprep.subr.mxu0 0.0
        %1413 = vmatpush1.msra.mxu0 0.0
        %1414 = vmatprep.subr.mxu0 0.0
        %1415 = vmatpush1.msra.mxu0 %v1381
        %1416 = vmatprep.subr.mxu0 0.0
        %1417 = vmatpush1.msra.mxu0 %v1380
        %1418 = vmatprep.subr.mxu0 0.0
        %1419 = vmatpush1.msra.mxu0 %v1379
        %1420 = vmatprep.subr.mxu0 0.0
        %1421 = vmatpush2.msra.mxu0 0.0
        %1422 = vmatprep.subr.mxu0 0.0
        %1423 = vmatpush2.msra.mxu0 0.0
        %1424 = vmatprep.subr.mxu0 0.0
        %1425 = vmatpush2.msra.mxu0 0.0
        %1426 = vmatprep.subr.mxu0 0.0
        %1427 = vmatpush2.msra.mxu0 0.0
        %1428 = vmatprep.subr.mxu0 0.0
        %1429 = vmatpush2.msra.mxu0 0.0
        %1430 = vmatprep.subr.mxu0 0.0
        %1431 = vmatpush2.msra.mxu0 0.0
        %1432 = vmatprep.subr.mxu0 0.0
        %1433 = vmatpush2.msra.mxu0 0.0
        %1434 = vmatprep.subr.mxu0 0.0
        %1435 = vmatpush2.msra.mxu0 0.0
        %1436 = vmatprep.subr.mxu0 0.0
        %1437 = vmatpush2.msra.mxu0 0.0
        %1438 = vmatprep.subr.mxu0 0.0
        %1439 = vmatpush2.msra.mxu0 0.0
        %1440 = vmatprep.subr.mxu0 0.0
        %1441 = vmatpush2.msra.mxu0 0.0
        %1442 = vmatprep.subr.mxu0 0.0
        %1443 = vmatpush2.msra.mxu0 0.0
        %1444 = vmatprep.subr.mxu0 0.0
        %1445 = vmatpush2.msra.mxu0 0.0
        %1446 = vmatprep.subr.mxu0 0.0
        %1447 = vmatpush2.msra.mxu0 0.0
        %1448 = vmatprep.subr.mxu0 0.0
        %1449 = vmatpush2.msra.mxu0 0.0
        %1450 = vmatprep.subr.mxu0 0.0
        %1451 = vmatpush2.msra.mxu0 0.0
        %1452 = vmatprep.mubr.f32.mxu0 0.0
        %1453 = vmatmul.mubr.f32.gmra.mxu0 %v833
        %v1454 = vpop.f32.mrf.mxu0
        %v1455 = vadd.f32 0.0, %v1454
        %v1456 = vpop.f32.mrf.mxu0
        %1457 = vmatprep.mubr.f32.mxu0 0.0
        %1458 = vmatmul.mubr.f32.gmra.mxu0 %v836
        %v1459 = vpop.f32.mrf.mxu0
        %v1460 = vadd.f32 0.0, %v1459
        %v1461 = vpop.f32.mrf.mxu0
        %1462 = vmatprep.mubr.f32.mxu0 0.0
        %1463 = vmatmul.mubr.f32.gmra.mxu0 %v839
        %v1464 = vpop.f32.mrf.mxu0
        %v1465 = vadd.f32 0.0, %v1464
        %v1466 = vpop.f32.mrf.mxu0
        %1467 = vmatprep.mubr.f32.mxu0 0.0
        %1468 = vmatmul.mubr.f32.gmra.mxu0 %v842
        %v1469 = vpop.f32.mrf.mxu0
        %v1470 = vadd.f32 0.0, %v1469
        %v1471 = vpop.f32.mrf.mxu0
        %1472 = vmatprep.mubr.f32.mxu0 0.0
        %1473 = vmatmul.mubr.f32.gmra.mxu0 %v845
        %v1474 = vpop.f32.mrf.mxu0
        %v1475 = vadd.f32 0.0, %v1474
        %v1476 = vpop.f32.mrf.mxu0
        %1477 = vmatprep.mubr.f32.mxu0 0.0
        %1478 = vmatmul.mubr.f32.gmra.mxu0 %v848
        %v1479 = vpop.f32.mrf.mxu0
        %v1480 = vadd.f32 0.0, %v1479
        %v1481 = vpop.f32.mrf.mxu0
        %1482 = vmatprep.mubr.f32.mxu0 0.0
        %1483 = vmatmul.mubr.f32.gmra.mxu0 %v851
        %v1484 = vpop.f32.mrf.mxu0
        %v1485 = vadd.f32 0.0, %v1484
        %v1486 = vpop.f32.mrf.mxu0
        %1487 = vmatprep.mubr.f32.mxu0 0.0
        %1488 = vmatmul.mubr.f32.gmra.mxu0 %v854
        %v1489 = vpop.f32.mrf.mxu0
        %v1490 = vadd.f32 0.0, %v1489
        %v1491 = vpop.f32.mrf.mxu0
        %1492 = vmatprep.mubr.f32.mxu0 0.0
        %1493 = vmatmul.mubr.f32.gmra.mxu0 %v857
        %v1494 = vpop.f32.mrf.mxu0
        %v1495 = vadd.f32 0.0, %v1494
        %v1496 = vpop.f32.mrf.mxu0
        %1497 = vmatprep.mubr.f32.mxu0 0.0
        %1498 = vmatmul.mubr.f32.gmra.mxu0 %v860
        %v1499 = vpop.f32.mrf.mxu0
        %v1500 = vadd.f32 0.0, %v1499
        %v1501 = vpop.f32.mrf.mxu0
        %1502 = vmatprep.mubr.f32.mxu0 0.0
        %1503 = vmatmul.mubr.f32.gmra.mxu0 %v863
        %v1504 = vpop.f32.mrf.mxu0
        %v1505 = vadd.f32 0.0, %v1504
        %v1506 = vpop.f32.mrf.mxu0
        %1507 = vmatprep.mubr.f32.mxu0 0.0
        %1508 = vmatmul.mubr.f32.gmra.mxu0 %v866
        %v1509 = vpop.f32.mrf.mxu0
        %v1510 = vadd.f32 0.0, %v1509
        %v1511 = vpop.f32.mrf.mxu0
        %1512 = vmatprep.mubr.f32.mxu0 0.0
        %1513 = vmatmul.mubr.f32.gmra.mxu0 %v869
        %v1514 = vpop.f32.mrf.mxu0
        %v1515 = vadd.f32 0.0, %v1514
        %v1516 = vpop.f32.mrf.mxu0
        %1517 = vmatprep.mubr.f32.mxu0 0.0
        %1518 = vmatmul.mubr.f32.gmra.mxu0 %v872
        %v1519 = vpop.f32.mrf.mxu0
        %v1520 = vadd.f32 0.0, %v1519
        %v1521 = vpop.f32.mrf.mxu0
        %1522 = vmatprep.mubr.f32.mxu0 0.0
        %1523 = vmatmul.mubr.f32.gmra.mxu0 %v875
        %v1524 = vpop.f32.mrf.mxu0
        %v1525 = vadd.f32 0.0, %v1524
        %v1526 = vpop.f32.mrf.mxu0
        %1527 = vmatprep.mubr.f32.mxu0 0.0
        %1528 = vmatmul.mubr.f32.gmra.mxu0 %v878
        %v1529 = vpop.f32.mrf.mxu0
        %v1530 = vadd.f32 0.0, %v1529
        %v1531 = vpop.f32.mrf.mxu0
        %1532 = vmatprep.mubr.f32.mxu0 0.0
        %1533 = vmatmul.mubr.f32.gmra.mxu0 %v881
        %v1534 = vpop.f32.mrf.mxu0
        %v1535 = vadd.f32 0.0, %v1534
        %v1536 = vpop.f32.mrf.mxu0
        %1537 = vmatprep.mubr.f32.mxu0 0.0
        %1538 = vmatmul.mubr.f32.gmra.mxu0 %v884
        %v1539 = vpop.f32.mrf.mxu0
        %v1540 = vadd.f32 0.0, %v1539
        %v1541 = vpop.f32.mrf.mxu0
        %1542 = vmatprep.mubr.f32.mxu0 0.0
        %1543 = vmatmul.mubr.f32.gmra.mxu0 %v887
        %v1544 = vpop.f32.mrf.mxu0
        %v1545 = vadd.f32 0.0, %v1544
        %v1546 = vpop.f32.mrf.mxu0
        %1547 = vmatprep.mubr.f32.mxu0 0.0
        %1548 = vmatmul.mubr.f32.gmra.mxu0 %v890
        %v1549 = vpop.f32.mrf.mxu0
        %v1550 = vadd.f32 0.0, %v1549
        %v1551 = vpop.f32.mrf.mxu0
        %1552 = vmatprep.mubr.f32.mxu0 0.0
        %1553 = vmatmul.mubr.f32.gmra.mxu0 %v893
        %v1554 = vpop.f32.mrf.mxu0
        %v1555 = vadd.f32 0.0, %v1554
        %v1556 = vpop.f32.mrf.mxu0
        %1557 = vmatprep.mubr.f32.mxu0 0.0
        %1558 = vmatmul.mubr.f32.gmra.mxu0 %v896
        %v1559 = vpop.f32.mrf.mxu0
        %v1560 = vadd.f32 0.0, %v1559
        %v1561 = vpop.f32.mrf.mxu0
        %1562 = vmatprep.mubr.f32.mxu0 0.0
        %1563 = vmatmul.mubr.f32.gmra.mxu0 %v899
        %v1564 = vpop.f32.mrf.mxu0
        %v1565 = vadd.f32 0.0, %v1564
        %v1566 = vpop.f32.mrf.mxu0
        %1567 = vmatprep.mubr.f32.mxu0 0.0
        %1568 = vmatmul.mubr.f32.gmra.mxu0 %v902
        %v1569 = vpop.f32.mrf.mxu0
        %v1570 = vadd.f32 0.0, %v1569
        %v1571 = vpop.f32.mrf.mxu0
        %1572 = vmatprep.mubr.f32.mxu0 0.0
        %1573 = vmatmul.mubr.f32.gmra.mxu0 %v905
        %v1574 = vpop.f32.mrf.mxu0
        %v1575 = vadd.f32 0.0, %v1574
        %v1576 = vpop.f32.mrf.mxu0
        %1577 = vmatprep.mubr.f32.mxu0 0.0
        %1578 = vmatmul.mubr.f32.gmra.mxu0 %v908
        %v1579 = vpop.f32.mrf.mxu0
        %v1580 = vadd.f32 0.0, %v1579
        %v1581 = vpop.f32.mrf.mxu0
        %1582 = vmatprep.mubr.f32.mxu0 0.0
        %1583 = vmatmul.mubr.f32.gmra.mxu0 %v911
        %v1584 = vpop.f32.mrf.mxu0
        %v1585 = vadd.f32 0.0, %v1584
        %v1586 = vpop.f32.mrf.mxu0
        %1587 = vmatprep.mubr.f32.mxu0 0.0
        %1588 = vmatmul.mubr.f32.gmra.mxu0 %v914
        %v1589 = vpop.f32.mrf.mxu0
        %v1590 = vadd.f32 0.0, %v1589
        %v1591 = vpop.f32.mrf.mxu0
        %1592 = vmatprep.mubr.f32.mxu0 0.0
        %1593 = vmatmul.mubr.f32.gmra.mxu0 %v917
        %v1594 = vpop.f32.mrf.mxu0
        %v1595 = vadd.f32 0.0, %v1594
        %v1596 = vpop.f32.mrf.mxu0
        %1597 = vmatprep.mubr.f32.mxu0 0.0
        %1598 = vmatmul.mubr.f32.gmra.mxu0 %v920
        %v1599 = vpop.f32.mrf.mxu0
        %v1600 = vadd.f32 0.0, %v1599
        %v1601 = vpop.f32.mrf.mxu0
        %1602 = vmatprep.mubr.f32.mxu0 0.0
        %1603 = vmatmul.mubr.f32.gmra.mxu0 %v1383
        %v1604 = vpop.f32.mrf.mxu0
        %v1605 = vadd.f32 0.0, %v1604
        %v1606 = vpop.f32.mrf.mxu0
        %1607 = vmatprep.mubr.f32.mxu0 0.0
        %1608 = vmatmul.mubr.f32.gmra.mxu0 %v1386
        %v1609 = vpop.f32.mrf.mxu0
        %v1610 = vadd.f32 0.0, %v1609
        %v1611 = vpop.f32.mrf.mxu0
        %1612 = vdwg.mxu0
        %v1613 = vadd.f32 %v1220, %v1455
        %v1614 = vadd.f32 %v1225, %v1460
        %v1615 = vadd.f32 %v1230, %v1465
        %v1616 = vadd.f32 %v1235, %v1470
        %v1617 = vadd.f32 %v1240, %v1475
        %v1618 = vadd.f32 %v1245, %v1480
        %v1619 = vadd.f32 %v1250, %v1485
        %v1620 = vadd.f32 %v1255, %v1490
        %v1621 = vadd.f32 %v1260, %v1495
        %v1622 = vadd.f32 %v1265, %v1500
        %v1623 = vadd.f32 %v1270, %v1505
        %v1624 = vadd.f32 %v1275, %v1510
        %v1625 = vadd.f32 %v1280, %v1515
        %v1626 = vadd.f32 %v1285, %v1520
        %v1627 = vadd.f32 %v1290, %v1525
        %v1628 = vadd.f32 %v1295, %v1530
        %v1629 = vadd.f32 %v1300, %v1535
        %v1630 = vadd.f32 %v1305, %v1540
        %v1631 = vadd.f32 %v1310, %v1545
        %v1632 = vadd.f32 %v1315, %v1550
        %v1633 = vadd.f32 %v1320, %v1555
        %v1634 = vadd.f32 %v1325, %v1560
        %v1635 = vadd.f32 %v1330, %v1565
        %v1636 = vadd.f32 %v1335, %v1570
        %v1637 = vadd.f32 %v1340, %v1575
        %v1638 = vadd.f32 %v1345, %v1580
        %v1639 = vadd.f32 %v1350, %v1585
        %v1640 = vadd.f32 %v1355, %v1590
        %v1641 = vadd.f32 %v1360, %v1595
        %v1642 = vadd.f32 %v1365, %v1600
        %v1643 = vadd.f32 %v1370, %v1605
        %v1644 = vadd.f32 %v1375, %v1610
        %v1645 = vld [vmem:[%s2] sm:$0x1]
        %v1647 = vlaneseq
        %v1648 = vshrl.u32 %v1647, 7
        %v1649 = vsub.s32 0, %v1648
        %v1650 = vrot.slane %v1645, %v1649
        %v1652 = vadd.f32 %v1613, %v1650
        %v1653 = vadd.f32 %v1614, %v1650
        %v1654 = vadd.f32 %v1615, %v1650
        %v1655 = vadd.f32 %v1616, %v1650
        %v1656 = vadd.f32 %v1617, %v1650
        %v1657 = vadd.f32 %v1618, %v1650
        %v1658 = vadd.f32 %v1619, %v1650
        %v1659 = vadd.f32 %v1620, %v1650
        %v1660 = vadd.f32 %v1621, %v1650
        %v1661 = vadd.f32 %v1622, %v1650
        %v1662 = vadd.f32 %v1623, %v1650
        %v1663 = vadd.f32 %v1624, %v1650
        %v1664 = vadd.f32 %v1625, %v1650
        %v1665 = vadd.f32 %v1626, %v1650
        %v1666 = vadd.f32 %v1627, %v1650
        %v1667 = vadd.f32 %v1628, %v1650
        %v1668 = vadd.f32 %v1629, %v1650
        %v1669 = vadd.f32 %v1630, %v1650
        %v1670 = vadd.f32 %v1631, %v1650
        %v1671 = vadd.f32 %v1632, %v1650
        %v1672 = vadd.f32 %v1633, %v1650
        %v1673 = vadd.f32 %v1634, %v1650
        %v1674 = vadd.f32 %v1635, %v1650
        %v1675 = vadd.f32 %v1636, %v1650
        %v1676 = vadd.f32 %v1637, %v1650
        %v1677 = vadd.f32 %v1638, %v1650
        %v1678 = vadd.f32 %v1639, %v1650
        %v1679 = vadd.f32 %v1640, %v1650
        %v1680 = vadd.f32 %v1641, %v1650
        %v1681 = vadd.f32 %v1642, %v1650
        %v1682 = vadd.f32 %v1643, %v1650
        %v1683 = vadd.f32 %v1644, %v1650
        %1684 = vst [vmem:[%s220] sm:$0xff] %v1652
        %1685 = vst [vmem:[%s220 + $0x8] sm:$0xff] %v1653
        %1686 = vst [vmem:[%s220 + $0x10] sm:$0xff] %v1654
        %1687 = vst [vmem:[%s220 + $0x18] sm:$0xff] %v1655
        %1688 = vst [vmem:[%s220 + $0x20] sm:$0xff] %v1656
        %1689 = vst [vmem:[%s220 + $0x28] sm:$0xff] %v1657
        %1690 = vst [vmem:[%s220 + $0x30] sm:$0xff] %v1658
        %1691 = vst [vmem:[%s220 + $0x38] sm:$0xff] %v1659
        %1692 = vst [vmem:[%s220 + $0x40] sm:$0xff] %v1660
        %1693 = vst [vmem:[%s220 + $0x48] sm:$0xff] %v1661
        %1694 = vst [vmem:[%s220 + $0x50] sm:$0xff] %v1662
        %1695 = vst [vmem:[%s220 + $0x58] sm:$0xff] %v1663
        %1696 = vst [vmem:[%s220 + $0x60] sm:$0xff] %v1664
        %1697 = vst [vmem:[%s220 + $0x68] sm:$0xff] %v1665
        %1698 = vst [vmem:[%s220 + $0x70] sm:$0xff] %v1666
        %1699 = vst [vmem:[%s220 + $0x78] sm:$0xff] %v1667
        %1700 = vst [vmem:[%s220 + $0x80] sm:$0xff] %v1668
        %1701 = vst [vmem:[%s220 + $0x88] sm:$0xff] %v1669
        %1702 = vst [vmem:[%s220 + $0x90] sm:$0xff] %v1670
        %1703 = vst [vmem:[%s220 + $0x98] sm:$0xff] %v1671
        %1704 = vst [vmem:[%s220 + $0xa0] sm:$0xff] %v1672
        %1705 = vst [vmem:[%s220 + $0xa8] sm:$0xff] %v1673
        %1706 = vst [vmem:[%s220 + $0xb0] sm:$0xff] %v1674
        %1707 = vst [vmem:[%s220 + $0xb8] sm:$0xff] %v1675
        %1708 = vst [vmem:[%s220 + $0xc0] sm:$0xff] %v1676
        %1709 = vst [vmem:[%s220 + $0xc8] sm:$0xff] %v1677
        %1710 = vst [vmem:[%s220 + $0xd0] sm:$0xff] %v1678
        %1711 = vst [vmem:[%s220 + $0xd8] sm:$0xff] %v1679
        %1712 = vst [vmem:[%s220 + $0xe0] sm:$0xff] %v1680
        %1713 = vst [vmem:[%s220 + $0xe8] sm:$0xff] %v1681
        %1714 = vst [vmem:[%s220 + $0xf0] sm:$0xff] %v1682
        %1715 = vst [vmem:[%s220 + $0xf8] sm:$0xff] %v1683
        %v1716 = vadd.f32 %v1613, %v1614
        %v1717 = vadd.f32 %v1716, %v1615
        %v1718 = vadd.f32 %v1717, %v1616
        %v1719 = vadd.f32 %v1718, %v1617
        %v1720 = vadd.f32 %v1719, %v1618
        %v1721 = vadd.f32 %v1720, %v1619
        %v1722 = vadd.f32 %v1721, %v1620
        %v1723 = vadd.f32 %v1722, %v1621
        %v1724 = vadd.f32 %v1723, %v1622
        %v1725 = vadd.f32 %v1724, %v1623
        %v1726 = vadd.f32 %v1725, %v1624
        %v1727 = vadd.f32 %v1726, %v1625
        %v1728 = vadd.f32 %v1727, %v1626
        %v1729 = vadd.f32 %v1728, %v1627
        %v1730 = vadd.f32 %v1729, %v1628
        %v1731 = vadd.f32 %v1730, %v1629
        %v1732 = vadd.f32 %v1731, %v1630
        %v1733 = vadd.f32 %v1732, %v1631
        %v1734 = vadd.f32 %v1733, %v1632
        %v1735 = vadd.f32 %v1734, %v1633
        %v1736 = vadd.f32 %v1735, %v1634
        %v1737 = vadd.f32 %v1736, %v1635
        %v1738 = vadd.f32 %v1737, %v1636
        %v1739 = vadd.f32 %v1738, %v1637
        %v1740 = vadd.f32 %v1739, %v1638
        %v1741 = vadd.f32 %v1740, %v1639
        %v1742 = vadd.f32 %v1741, %v1640
        %v1743 = vadd.f32 %v1742, %v1641
        %v1744 = vadd.f32 %v1743, %v1642
        %v1745 = vadd.f32 %v1744, %v1643
        %v1746 = vadd.f32 %v1745, %v1644
        %v1747 = vrot.slane %v1746, 4
        %v1748 = vadd.f32 %v1746, %v1747
        %v1749 = vrot.slane %v1748, 2
        %v1750 = vadd.f32 %v1748, %v1749
        %v1751 = vrot.slane %v1750, 1
        %v1752 = vadd.f32 %v1750, %v1751
        %v1753 = vmul.f32 %v1613, %v1613
        %v1754 = vmul.f32 %v1614, %v1614
        %v1755 = vmul.f32 %v1615, %v1615
        %v1756 = vmul.f32 %v1616, %v1616
        %v1757 = vmul.f32 %v1617, %v1617
        %v1758 = vmul.f32 %v1618, %v1618
        %v1759 = vmul.f32 %v1619, %v1619
        %v1760 = vmul.f32 %v1620, %v1620
        %v1761 = vmul.f32 %v1621, %v1621
        %v1762 = vmul.f32 %v1622, %v1622
        %v1763 = vmul.f32 %v1623, %v1623
        %v1764 = vmul.f32 %v1624, %v1624
        %v1765 = vmul.f32 %v1625, %v1625
        %v1766 = vmul.f32 %v1626, %v1626
        %v1767 = vmul.f32 %v1627, %v1627
        %v1768 = vmul.f32 %v1628, %v1628
        %v1769 = vmul.f32 %v1629, %v1629
        %v1770 = vmul.f32 %v1630, %v1630
        %v1771 = vmul.f32 %v1631, %v1631
        %v1772 = vmul.f32 %v1632, %v1632
        %v1773 = vmul.f32 %v1633, %v1633
        %v1774 = vmul.f32 %v1634, %v1634
        %v1775 = vmul.f32 %v1635, %v1635
        %v1776 = vmul.f32 %v1636, %v1636
        %v1777 = vmul.f32 %v1637, %v1637
        %v1778 = vmul.f32 %v1638, %v1638
        %v1779 = vmul.f32 %v1639, %v1639
        %v1780 = vmul.f32 %v1640, %v1640
        %v1781 = vmul.f32 %v1641, %v1641
        %v1782 = vmul.f32 %v1642, %v1642
        %v1783 = vmul.f32 %v1643, %v1643
        %v1784 = vmul.f32 %v1644, %v1644
        %v1785 = vadd.f32 %v1753, %v1754
        %v1786 = vadd.f32 %v1785, %v1755
        %v1787 = vadd.f32 %v1786, %v1756
        %v1788 = vadd.f32 %v1787, %v1757
        %v1789 = vadd.f32 %v1788, %v1758
        %v1790 = vadd.f32 %v1789, %v1759
        %v1791 = vadd.f32 %v1790, %v1760
        %v1792 = vadd.f32 %v1791, %v1761
        %v1793 = vadd.f32 %v1792, %v1762
        %v1794 = vadd.f32 %v1793, %v1763
        %v1795 = vadd.f32 %v1794, %v1764
        %v1796 = vadd.f32 %v1795, %v1765
        %v1797 = vadd.f32 %v1796, %v1766
        %v1798 = vadd.f32 %v1797, %v1767
        %v1799 = vadd.f32 %v1798, %v1768
        %v1800 = vadd.f32 %v1799, %v1769
        %v1801 = vadd.f32 %v1800, %v1770
        %v1802 = vadd.f32 %v1801, %v1771
        %v1803 = vadd.f32 %v1802, %v1772
        %v1804 = vadd.f32 %v1803, %v1773
        %v1805 = vadd.f32 %v1804, %v1774
        %v1806 = vadd.f32 %v1805, %v1775
        %v1807 = vadd.f32 %v1806, %v1776
        %v1808 = vadd.f32 %v1807, %v1777
        %v1809 = vadd.f32 %v1808, %v1778
        %v1810 = vadd.f32 %v1809, %v1779
        %v1811 = vadd.f32 %v1810, %v1780
        %v1812 = vadd.f32 %v1811, %v1781
        %v1813 = vadd.f32 %v1812, %v1782
        %v1814 = vadd.f32 %v1813, %v1783
        %v1815 = vadd.f32 %v1814, %v1784
        %v1816 = vrot.slane %v1815, 4
        %v1817 = vadd.f32 %v1815, %v1816
        %v1818 = vrot.slane %v1817, 2
        %v1819 = vadd.f32 %v1817, %v1818
        %v1820 = vrot.slane %v1819, 1
        %v1821 = vadd.f32 %v1819, %v1820
        %vm1822 = vcmask 1040384
        %v1823 = vsel %vm1822, %v1752, %v1821
        %1824 = vst [vmem:[%s227] sm:$0x3] %v1823
        %s1825 = sand.u32 %s114, 1
        %s1826 = scalar_lea.sflag [#allocation3], %s1825
        %s1827 = sand.u32 %s114, 1
        %s1828 = smul.addr %s1827, 256
        %s1829 = scalar_lea.vmem [#allocation2], %s1828
        %s1830 = sand.u32 %s142, 1
        %s1831 = scalar_lea.sflag [#allocation5], %s1830
        %s1832 = sand.u32 %s142, 1
        %s1833 = smul.addr %s1832, 2
        %s1834 = scalar_lea.vmem [#allocation4], %s1833
        // Predicated region
        $region33: #{tpu_custom_call.1} parent=31 // pred_check
          %p1835 = pneg %p124
        $region34: #{tpu_custom_call.1} parent=31 // pred_check_branch
          %1837 = sbr.rel (%p1835) target = $region36
        $region35: #{tpu_custom_call.1} parent=31 // pred_region
          %s1838 = smul.u32 16, %s27
          %s1840 = ssub.s32 4096, 4096
          %1841 = vsyncadd %s1826, %s1840
          %s1842 = smul.addr %s1838, 2
          %s1843 = smul.addr %s26, 32
          %s1844 = sadd.s32 %s1842, %s1843
          %s1845 = smul.addr %s1844, 128
          %s1846 = scalar_lea.hbm %s3, %s1845
          %s1847 = sshll.u32 %s1829, 4
          %s1848 = int_to_ptr.vmem [resolvable:$true] %s1847
          %1853 = dma.vmem_to_hbm [thread:$0]  %s1848, 4096, %s1846, %s1826, 128, 128, 8
        $region36: #{tpu_custom_call.1} parent=31 // pred_fallthru
          _
        // Predicated region
        $region37: #{tpu_custom_call.1} parent=31 // pred_check
          %p1854 = pneg %p152
        $region38: #{tpu_custom_call.1} parent=31 // pred_check_branch
          %1856 = sbr.rel (%p1854) target = $region40
        $region39: #{tpu_custom_call.1} parent=31 // pred_region
          %s1858 = ssub.s32 32, 32
          %1859 = vsyncadd %s1831, %s1858
          %s1860 = sadd.s32 %s27, %s26
          %s1861 = smul.addr %s1860, 32
          %s1862 = scalar_lea.hbm %s4, %s1861
          %s1864 = sshll.u32 %s1834, 4
          %s1865 = int_to_ptr.vmem [resolvable:$true] %s1864
          %1867 = dma.vmem_to_hbm [thread:$0]  %s1865, 32, %s1862, %s1831
        $region40: #{tpu_custom_call.1} parent=31 // pred_fallthru
          _
      $region32: #{tpu_custom_call.1} parent=5 // pred_fallthru
        _
      %p1868 = scmp.le.s32.totalorder 2, %s17
      // Predicated region
      $region41: #{tpu_custom_call.1} parent=5 // pred_check
        %p1869 = pneg %p1868
      $region42: #{tpu_custom_call.1} parent=5 // pred_check_branch
        %1871 = sbr.rel (%p1869) target = $region44
      $region43: #{tpu_custom_call.1} parent=5 // pred_region
        %s1872 = ssub.s32 %s17, 2
        // Predicated region
        $region45: #{tpu_custom_call.1} parent=43 // pred_check
          %p1873 = pneg %p130
        $region46: #{tpu_custom_call.1} parent=43 // pred_check_branch
          %1875 = sbr.rel (%p1873) target = $region48
        $region47: #{tpu_custom_call.1} parent=43 // pred_region
          %s1876 = sand.u32 %s115, 1
          %s1877 = scalar_lea.sflag [#allocation3], %s1876
          %s1878 = sand.u32 %s115, 1
          %s1879 = smul.addr %s1878, 256
          %s1880 = scalar_lea.vmem [#allocation2], %s1879
          %1881 = dma.done %s1877, 4096
        $region48: #{tpu_custom_call.1} parent=43 // pred_fallthru
          _
        // Predicated region
        $region49: #{tpu_custom_call.1} parent=43 // pred_check
          %p1882 = pneg %p158
        $region50: #{tpu_custom_call.1} parent=43 // pred_check_branch
          %1884 = sbr.rel (%p1882) target = $region52
        $region51: #{tpu_custom_call.1} parent=43 // pred_region
          %s1885 = sand.u32 %s143, 1
          %s1886 = scalar_lea.sflag [#allocation5], %s1885
          %s1887 = sand.u32 %s143, 1
          %s1888 = smul.addr %s1887, 2
          %s1889 = scalar_lea.vmem [#allocation4], %s1888
          %1890 = dma.done %s1886, 32
        $region52: #{tpu_custom_call.1} parent=43 // pred_fallthru
          _
      $region44: #{tpu_custom_call.1} parent=5 // pred_fallthru
        _
    $region6: #{tpu_custom_call.1} parent=1 // loop_footer
      %s21 = sadd.s32 1, %s17
    $region7: #{tpu_custom_call.1} parent=1 // loop_footer_branch
      %16 = sbr.rel target = $region3
    $region8: #{tpu_custom_call.1} parent=1 // loop_exit
      _
    %1891 = vsyncpa [#allocation3], 1
    %s1892 = scalar_lea.sflag [#allocation3], 1
    %1893 = vsyncpa %s1892, 1
    %1894 = vsyncpa [#allocation5], 1
    %s1895 = scalar_lea.sflag [#allocation5], 1
    %1896 = vsyncpa %s1895, 1

</llo_original>
